<compile_context>
chip_gen: v7x
topology: tpu7x:2x2x1
jax: 0.10.0
libtpu: 0.0.40
codegen_flags: <defaults>
</compile_context>

<pallas_src>
import functools

import jax
import jax.numpy as jnp
from jax import lax
from jax.experimental import pallas as pl
from jax.experimental.pallas import tpu as pltpu


# ----------------------------------------------------------------------------
# In-kernel helpers (traced inside Pallas kernels only)
# ----------------------------------------------------------------------------
def _elu(x):
    return jnp.where(x > 0.0, x, jnp.exp(jnp.minimum(x, 0.0)) - 1.0)


def _row_softmax(e):
    e = e - jnp.max(e, axis=1, keepdims=True)
    p = jnp.exp(e)
    return p * pl.reciprocal(jnp.sum(p, axis=1, keepdims=True), approx=True)


def _gat_attention(h, a1, a2, bias, lrelu_alpha):
    # e_ij = LeakyReLU(a1 . h_i + a2 . h_j); column term via VPU reduce,
    # row term via a single-row dot_general (avoids an in-kernel transpose).
    e1 = jnp.sum(h * a1, axis=-1, keepdims=True)                       # [N, 1]
    e2 = lax.dot_general(a2, h, (((1,), (1,)), ((), ())),
                         preferred_element_type=jnp.float32)           # [1, N]
    e = e1 + e2
    e = jnp.where(e >= 0.0, e, lrelu_alpha * e)                        # LeakyReLU
    attn = _row_softmax(e + bias)                                      # adj mask
    # dropout on attention is identity in eval mode (training=False)
    return jnp.dot(attn, h, preferred_element_type=jnp.float32)        # [N, F]


# ----------------------------------------------------------------------------
# Kernel 1: fused multi-scale GAT (all heads + out-attention per scale)
# ----------------------------------------------------------------------------
def _ms_gat_kernel(x_ref, bias_ref, wh_ref, a1h_ref, a2h_ref,
                   wo_ref, a1o_ref, a2o_ref, o_ref,
                   *, nheads, h1, lrelu_alpha):
    x = x_ref[...]
    bias = bias_ref[...]

    # one wide projection for all heads: x @ [W_h0 | W_h1 | ...]
    h_all = jnp.dot(x, wh_ref[0], preferred_element_type=jnp.float32)  # [N, nheads*h1]
    a1h = a1h_ref[0]                                                   # [1, nheads*h1]
    a2h = a2h_ref[0]

    heads = []
    for t in range(nheads):
        lo, hi = t * h1, (t + 1) * h1
        hp = _gat_attention(h_all[:, lo:hi], a1h[:, lo:hi], a2h[:, lo:hi],
                            bias, lrelu_alpha)
        heads.append(_elu(hp))                       # concat=True -> F.elu
    xh = jnp.concatenate(heads, axis=1)              # [N, nheads*h1]

    # out attention layer (concat=False) + outer F.elu + F.softmax(dim=1)
    ho = jnp.dot(xh, wo_ref[0], preferred_element_type=jnp.float32)    # [N, x_dim]
    hp = _gat_attention(ho, a1o_ref[0], a2o_ref[0], bias, lrelu_alpha)
    o_ref[0] = _row_softmax(_elu(hp))


def pallas_ms_gat(x, adj_bias, gp, *, nheads, h1, lrelu_alpha=0.1):
    N, x_dim = x.shape
    scale = gp["Wh"].shape[0]
    hw = nheads * h1
    kern = functools.partial(_ms_gat_kernel, nheads=nheads, h1=h1,
                             lrelu_alpha=lrelu_alpha)
    return pl.pallas_call(
        kern,
        out_shape=jax.ShapeDtypeStruct((scale, N, x_dim), jnp.float32),
        grid=(scale,),
        in_specs=[
            pl.BlockSpec((N, x_dim), lambda s: (0, 0)),
            pl.BlockSpec((N, N), lambda s: (0, 0)),
            pl.BlockSpec((1, x_dim, hw), lambda s: (s, 0, 0)),
            pl.BlockSpec((1, 1, hw), lambda s: (s, 0, 0)),
            pl.BlockSpec((1, 1, hw), lambda s: (s, 0, 0)),
            pl.BlockSpec((1, hw, x_dim), lambda s: (s, 0, 0)),
            pl.BlockSpec((1, 1, x_dim), lambda s: (s, 0, 0)),
            pl.BlockSpec((1, 1, x_dim), lambda s: (s, 0, 0)),
        ],
        out_specs=pl.BlockSpec((1, N, x_dim), lambda s: (s, 0, 0)),
        compiler_params=pltpu.CompilerParams(
            dimension_semantics=("parallel",)),      # v7x: shard scales over TCs
    )(x, adj_bias, gp["Wh"], gp["a1h"], gp["a2h"],
      gp["Wo"], gp["a1o"], gp["a2o"])


# ----------------------------------------------------------------------------
# Kernel 2: fused SePaL head (scale-mix linear+softmax, h/c/f encoders, u-MLP)
# ----------------------------------------------------------------------------
def _sepal_head_kernel(xs_ref, data_ref, lw_ref, lb_ref,
                       ew1_ref, eb1_ref, ealpha_ref, ew2_ref, eb2_ref,
                       uw1_ref, ub1_ref, ualpha_ref, uw2r_ref,
                       logits_ref, csamp_ref, *, scale, n):
    def encoder(xv, i):  # Linear -> PReLU (scalar alpha) -> Linear
        h = jnp.dot(xv, ew1_ref[i], preferred_element_type=jnp.float32) + eb1_ref[i]
        h = jnp.where(h >= 0.0, h, ealpha_ref[i] * h)
        return jnp.dot(h, ew2_ref[i], preferred_element_type=jnp.float32) + eb2_ref[i]

    # hs = softmax(concat_s(xs_s) @ lW + lb), computed as sum of per-scale matmuls
    z = lb_ref[...]
    for s in range(scale):
        z = z + jnp.dot(xs_ref[s], lw_ref[s], preferred_element_type=jnp.float32)
    hs = _row_softmax(z)                                          # [N, x_dim]

    fs = encoder(data_ref[...], 2)                                # f-encoder [N, h_dim]
    G = jnp.sum(fs[2:, :], axis=0, keepdims=True)                 # [1, h_dim]

    # n == 1 -> exactly one existing cluster {event 0} (K == 1).
    # hypothesis rows: row 0 = join (h_0 + h_n); rows 1..n+1 = new-cluster rows.
    row_join = hs[0:1, :] + hs[n:n + 1, :]
    rows_new = hs[0:n + 1, :]
    stack = jnp.concatenate([row_join, rows_new], axis=0)         # [3, x_dim]

    h_out = encoder(stack, 0)                                     # h-encoder
    c_out = encoder(stack, 1)                                     # c-encoder

    Hk = jnp.concatenate([h_out[0:1, :], h_out[1:2, :] + h_out[2:3, :]], axis=0)
    Ck = jnp.concatenate([c_out[0:1, :], c_out[1:2, :] + c_out[2:3, :]], axis=0)
    Gb = jnp.concatenate([G, G], axis=0)
    R = jnp.concatenate([Hk, Ck, Gb], axis=1)                     # [K+1, f+c+h]

    uh = jnp.dot(R, uw1_ref[...], preferred_element_type=jnp.float32) + ub1_ref[...]
    uh = jnp.where(uh >= 0.0, uh, ualpha_ref[...] * uh)
    # 1-wide output head as a VPU reduce (no degenerate MXU matmul)
    logits_ref[...] = jnp.sum(uh * uw2r_ref[...], axis=1, keepdims=True)   # [K+1, 1]

    # c-codes of the new-cluster rows == encode_samples[:, 0, :]
    csamp_ref[...] = c_out[1:, :]


def _full_spec(a):
    nd = a.ndim
    return pl.BlockSpec(a.shape, lambda *_: (0,) * nd)


def pallas_sepal_head(P, xs3, data, *, n):
    scale = xs3.shape[0]
    f_dim = P["eW2"].shape[2]
    K1 = 2                      # K + 1 hypotheses (K == 1 at the first step)
    kern = functools.partial(_sepal_head_kernel, scale=scale, n=n)
    args = (xs3, data, P["lW3"], P["lb"], P["eW1"], P["eb1"], P["ealpha"],
            P["eW2"], P["eb2"], P["uW1"], P["ub1"], P["ualpha"], P["uW2r"])
    return pl.pallas_call(
        kern,
        out_shape=(jax.ShapeDtypeStruct((K1, 1), jnp.float32),
                   jax.ShapeDtypeStruct((K1, f_dim), jnp.float32)),
        grid=(1,),
        in_specs=[_full_spec(a) for a in args],
        out_specs=(pl.BlockSpec((K1, 1), lambda i: (0, 0)),
                   pl.BlockSpec((K1, f_dim), lambda i: (0, 0))),
    )(*args)


# ----------------------------------------------------------------------------
# Parameter initialization (deterministic, in-script; matches PyTorch inits)
# ----------------------------------------------------------------------------
def _init_linear(key, fan_in, fan_out):
    k1, k2 = jax.random.split(key)
    bound = 1.0 / (fan_in ** 0.5)
    W = jax.random.uniform(k1, (fan_in, fan_out), jnp.float32, -bound, bound)
    b = jax.random.uniform(k2, (fan_out,), jnp.float32, -bound, bound)
    return W, b


def _xavier(key, shape, gain=1.414):
    bound = gain * (6.0 / (shape[0] + shape[1])) ** 0.5
    return jax.random.uniform(key, shape, jnp.float32, -bound, bound)


def _init_gal(key, in_f, out_f):
    k1, k2 = jax.random.split(key)
    W = _xavier(k1, (in_f, out_f))
    a = _xavier(k2, (2 * out_f, 1))
    return W, a[:out_f, 0], a[out_f:, 0]


def init_ms_gat(key, x_dim, h1, nheads, scale):
    Wh, a1h, a2h, Wo, a1o, a2o = [], [], [], [], [], []
    skeys = jax.random.split(key, scale)
    for s in range(scale):
        hkeys = jax.random.split(skeys[s], nheads + 1)
        Ws, a1s, a2s = [], [], []
        for t in range(nheads):
            W, a1, a2 = _init_gal(hkeys[t], x_dim, h1)
            Ws.append(W); a1s.append(a1); a2s.append(a2)
        Wh.append(jnp.concatenate(Ws, axis=1))            # [x_dim, nheads*h1]
        a1h.append(jnp.concatenate(a1s)[None, :])         # [1, nheads*h1]
        a2h.append(jnp.concatenate(a2s)[None, :])
        W, a1, a2 = _init_gal(hkeys[-1], nheads * h1, x_dim)
        Wo.append(W); a1o.append(a1[None, :]); a2o.append(a2[None, :])
    return dict(Wh=jnp.stack(Wh), a1h=jnp.stack(a1h), a2h=jnp.stack(a2h),
                Wo=jnp.stack(Wo), a1o=jnp.stack(a1o), a2o=jnp.stack(a2o))


def _init_encoder(key, in_dim, H, out_dim):
    k1, k2 = jax.random.split(key)
    W1, b1 = _init_linear(k1, in_dim, H)
    W2, b2 = _init_linear(k2, H, out_dim)
    return W1, b1.reshape(1, H), W2, b2.reshape(1, out_dim)


def init_sepal(key, cfg):
    kh, kf, kc, ku, kg, kms, kl = jax.random.split(key, 7)
    x, H = cfg["x_dim"], cfg["H_dim"]
    hd, fd, cd = cfg["h_dim"], cfg["f_dim"], cfg["c_dim"]
    P = {}
    # event encoders, stacked along a leading index: 0 = h, 1 = c, 2 = f
    hW1, hb1, hW2, hb2 = _init_encoder(kh, x, H, hd)
    cW1, cb1, cW2, cb2 = _init_encoder(kc, x, H, cd)
    fW1, fb1, fW2, fb2 = _init_encoder(kf, x, H, hd)
    P["eW1"] = jnp.stack([hW1, cW1, fW1])
    P["eb1"] = jnp.stack([hb1, cb1, fb1])
    P["ealpha"] = jnp.full((3, 1, 1), 0.25, jnp.float32)
    P["eW2"] = jnp.stack([hW2, cW2, fW2])
    P["eb2"] = jnp.stack([hb2, cb2, fb2])
    # u: Linear(f+h+c, H) -> PReLU -> Linear(H, 1, bias=False)
    uk1, uk2 = jax.random.split(ku)
    uW1, ub1 = _init_linear(uk1, fd + hd + cd, H)
    uW2, _ = _init_linear(uk2, H, 1)
    P["uW1"], P["ub1"] = uW1, ub1.reshape(1, H)
    P["ualpha"] = jnp.full((1, 1), 0.25, jnp.float32)
    P["uW2r"] = uW2.reshape(1, H)
    # g: Linear(f, H) -> PReLU -> Linear(H, f, bias=False)  (InfoNCE, plain JAX)
    gk1, gk2 = jax.random.split(kg)
    gW1, gb1 = _init_linear(gk1, fd, H)
    gW2, _ = _init_linear(gk2, H, fd)
    P["g"] = (gW1, gb1.reshape(1, H), jnp.full((1, 1), 0.25, jnp.float32), gW2)
    # MultiScaleGAT + mixing linear
    P["ms_gat"] = init_ms_gat(kms, x, cfg["h1_dim"], cfg["nheads"], cfg["scale"])
    lW, lb = _init_linear(kl, x * cfg["scale"], x)
    P["lW3"] = lW.reshape(cfg["scale"], x, x)   # per-scale blocks of the mix matrix
    P["lb"] = lb.reshape(1, x)
    return P


# ----------------------------------------------------------------------------
# Forward pass
# ----------------------------------------------------------------------------
def sepal_forward(P, data, cs, n, adj, cfg):
    """First-step (n == 1) forward of SePaL.  Returns (logprobs, nce)."""
    assert n == 1  # TODO(synk): n > 1 needs the cross-step cluster bookkeeping
    #              (Python-level state carry across calls); only step 1 runs here.
    B = 1
    f_dim = cfg["f_dim"]
    K = len(set(list(cs[:n])))
    assert K == 1

    # adjacency mask as an additive bias, computed once for all heads/scales
    adj_bias = jnp.where(adj > 0.0, jnp.float32(0.0), jnp.float32(-9e15))

    # kernel 1: fused multi-scale / multi-head GAT
    xs3 = pallas_ms_gat(data, adj_bias, P["ms_gat"],
                        nheads=cfg["nheads"], h1=cfg["h1_dim"], lrelu_alpha=0.1)
    # kernel 2: scale-mix linear+softmax, event encoders, u-MLP over hypotheses
    logits, csamp = pallas_sepal_head(P, xs3, data, n=n)

    # final log-softmax over cluster choices (tiny, plain JAX glue)
    logprobs = logits[:, 0][None, :]                               # [1, K+1]
    m = jnp.max(logprobs, axis=1, keepdims=True)
    logprobs = logprobs - m - jnp.log(
        jnp.sum(jnp.exp(logprobs - m), axis=1, keepdims=True))

    # InfoNCE against previous cluster codes (all zeros at n == 1) — plain JAX
    encode_samples = csamp[:, None, :]                             # [K+1, B, f]
    previous_v_K = jnp.zeros((K, B, f_dim), jnp.float32)
    gW1, gb1, galpha, gW2 = P["g"]
    nce = jnp.float32(0.0)
    for i in range(K):
        gh = previous_v_K[i] @ gW1 + gb1
        gh = jnp.where(gh >= 0.0, gh, galpha * gh)
        gv = gh @ gW2                                              # [B, f]
        total = encode_samples[i] @ gv.T                           # [B, B]
        lsm = total - jax.nn.logsumexp(total, axis=1, keepdims=True)
        nce = nce + jnp.sum(jnp.diag(lsm))
    nce = nce / (-1.0 * B * K)
    return logprobs, nce


# ----------------------------------------------------------------------------
if __name__ == "__main__":
    cfg = dict(x_dim=32, H_dim=32, h_dim=32, f_dim=32, c_dim=32,
               h1_dim=16, nheads=2, scale=2)
    N = 8

    key = jax.random.PRNGKey(0)
    kp, kd, ka = jax.random.split(key, 3)
    P = init_sepal(kp, cfg)

    data = jax.random.normal(kd, (N, cfg["x_dim"]), jnp.float32)
    adj_r = jax.random.uniform(ka, (N, N))
    adj = ((adj_r + adj_r.T) > 0.7).astype(jnp.float32)
    adj = jnp.maximum(adj, jnp.eye(N, dtype=jnp.float32))          # self loops
    cs = [0] * N
    n = 1

    logprobs, nce = sepal_forward(P, data, cs, n, adj, cfg)
    jax.block_until_ready((logprobs, nce))
    assert logprobs.shape == (1, 2)
    print("KERNEL_OK")
</pallas_src>

<mosaic_0001>
module attributes {stable_mosaic.version = 11 : i64} {
  func.func @_ms_gat_kernel(%arg0: i32, %arg1: memref<8x32xf32, #tpu.memory_space<vmem>>, %arg2: memref<8x8xf32, #tpu.memory_space<vmem>>, %arg3: memref<1x32x32xf32, #tpu.memory_space<vmem>>, %arg4: memref<1x1x32xf32, #tpu.memory_space<vmem>>, %arg5: memref<1x1x32xf32, #tpu.memory_space<vmem>>, %arg6: memref<1x32x32xf32, #tpu.memory_space<vmem>>, %arg7: memref<1x1x32xf32, #tpu.memory_space<vmem>>, %arg8: memref<1x1x32xf32, #tpu.memory_space<vmem>>, %arg9: memref<1x8x32xf32, #tpu.memory_space<vmem>>) attributes {dimension_semantics = [#tpu.dimension_semantics<parallel>], iteration_bounds = array<i64: 2>, scalar_prefetch = 0 : i64, scratch_operands = 0 : i64, tpu.core_type = #tpu.core_type<tc>, window_params = [{pipeline_mode = #tpu.pipeline_mode<synchronous>, transform_indices = @transform_0, window_bounds = array<i64: 8, 32>}, {pipeline_mode = #tpu.pipeline_mode<synchronous>, transform_indices = @transform_1, window_bounds = array<i64: 8, 8>}, {transform_indices = @transform_2, window_bounds = array<i64: 1, 32, 32>}, {transform_indices = @transform_3, window_bounds = array<i64: 1, 1, 32>}, {transform_indices = @transform_4, window_bounds = array<i64: 1, 1, 32>}, {transform_indices = @transform_5, window_bounds = array<i64: 1, 32, 32>}, {transform_indices = @transform_6, window_bounds = array<i64: 1, 1, 32>}, {transform_indices = @transform_7, window_bounds = array<i64: 1, 1, 32>}, {transform_indices = @transform_8, window_bounds = array<i64: 1, 8, 32>}]} {
    %c0 = arith.constant 0 : index
    %c0_0 = arith.constant 0 : index
    %0 = vector.load %arg1[%c0, %c0_0] : memref<8x32xf32, #tpu.memory_space<vmem>>, vector<8x32xf32>
    %c0_1 = arith.constant 0 : index
    %c0_2 = arith.constant 0 : index
    %1 = vector.load %arg2[%c0_1, %c0_2] : memref<8x8xf32, #tpu.memory_space<vmem>>, vector<8x8xf32>
    %c0_3 = arith.constant 0 : index
    %c0_4 = arith.constant 0 : index
    %c0_5 = arith.constant 0 : index
    %2 = vector.load %arg3[%c0_3, %c0_4, %c0_5] : memref<1x32x32xf32, #tpu.memory_space<vmem>>, vector<1x32x32xf32>
    %3 = vector.shape_cast %2 : vector<1x32x32xf32> to vector<32x32xf32>
    %cst = arith.constant dense<0.000000e+00> : vector<8x32xf32>
    %4 = tpu.matmul %0, %3, %cst {dimension_numbers = #tpu.dot_dimension_numbers<[1], [0], [0], [1], [0, 0, 1, 1], [], []>} : vector<8x32xf32>, vector<32x32xf32>, vector<8x32xf32> -> vector<8x32xf32>
    %c0_6 = arith.constant 0 : index
    %c0_7 = arith.constant 0 : index
    %c0_8 = arith.constant 0 : index
    %5 = vector.load %arg4[%c0_6, %c0_7, %c0_8] : memref<1x1x32xf32, #tpu.memory_space<vmem>>, vector<1x1x32xf32>
    %6 = vector.shape_cast %5 : vector<1x1x32xf32> to vector<1x32xf32>
    %c0_9 = arith.constant 0 : index
    %c0_10 = arith.constant 0 : index
    %c0_11 = arith.constant 0 : index
    %7 = vector.load %arg5[%c0_9, %c0_10, %c0_11] : memref<1x1x32xf32, #tpu.memory_space<vmem>>, vector<1x1x32xf32>
    %8 = vector.shape_cast %7 : vector<1x1x32xf32> to vector<1x32xf32>
    %9 = vector.extract_strided_slice %4 {offsets = [0, 0], sizes = [8, 16], strides = [1, 1]} : vector<8x32xf32> to vector<8x16xf32>
    %10 = vector.extract_strided_slice %6 {offsets = [0, 0], sizes = [1, 16], strides = [1, 1]} : vector<1x32xf32> to vector<1x16xf32>
    %11 = vector.extract_strided_slice %8 {offsets = [0, 0], sizes = [1, 16], strides = [1, 1]} : vector<1x32xf32> to vector<1x16xf32>
    %12 = vector.broadcast %10 : vector<1x16xf32> to vector<8x16xf32>
    %13 = arith.mulf %9, %12 : vector<8x16xf32>
    %cst_12 = arith.constant dense<0.000000e+00> : vector<8xf32>
    %14 = vector.multi_reduction <add>, %13, %cst_12 [1] : vector<8x16xf32> to vector<8xf32>
    %15 = vector.shape_cast %14 : vector<8xf32> to vector<8x1xf32>
    %cst_13 = arith.constant dense<0.000000e+00> : vector<1x8xf32>
    %16 = tpu.matmul %11, %9, %cst_13 {dimension_numbers = #tpu.dot_dimension_numbers<[1], [1], [0], [0], [0, 0, 1, 0], [], []>} : vector<1x16xf32>, vector<8x16xf32>, vector<1x8xf32> -> vector<1x8xf32>
    %17 = vector.broadcast %15 : vector<8x1xf32> to vector<8x8xf32>
    %18 = vector.broadcast %16 : vector<1x8xf32> to vector<8x8xf32>
    %19 = arith.addf %17, %18 : vector<8x8xf32>
    %cst_14 = arith.constant 0.000000e+00 : f32
    %20 = vector.broadcast %cst_14 : f32 to vector<8x8xf32>
    %21 = arith.cmpf oge, %19, %20 : vector<8x8xf32>
    %cst_15 = arith.constant 1.000000e-01 : f32
    %22 = vector.broadcast %cst_15 : f32 to vector<8x8xf32>
    %23 = arith.mulf %22, %19 : vector<8x8xf32>
    %24 = arith.select %21, %19, %23 : vector<8x8xi1>, vector<8x8xf32>
    %25 = arith.addf %24, %1 : vector<8x8xf32>
    %cst_16 = arith.constant dense<0xFF800000> : vector<8xf32>
    %26 = vector.multi_reduction <maximumf>, %25, %cst_16 [1] : vector<8x8xf32> to vector<8xf32>
    %27 = vector.shape_cast %26 : vector<8xf32> to vector<8x1xf32>
    %28 = vector.broadcast %27 : vector<8x1xf32> to vector<8x8xf32>
    %29 = arith.subf %25, %28 : vector<8x8xf32>
    %30 = math.exp %29 : vector<8x8xf32>
    %cst_17 = arith.constant dense<0.000000e+00> : vector<8xf32>
    %31 = vector.multi_reduction <add>, %30, %cst_17 [1] : vector<8x8xf32> to vector<8xf32>
    %32 = vector.shape_cast %31 : vector<8xf32> to vector<8x1xf32>
    %33 = tpu.reciprocal %32 {approx = true} : vector<8x1xf32> -> vector<8x1xf32>
    %34 = vector.broadcast %33 : vector<8x1xf32> to vector<8x8xf32>
    %35 = arith.mulf %30, %34 : vector<8x8xf32>
    %cst_18 = arith.constant dense<0.000000e+00> : vector<8x16xf32>
    %36 = tpu.matmul %35, %9, %cst_18 {dimension_numbers = #tpu.dot_dimension_numbers<[1], [0], [0], [1], [0, 0, 1, 1], [], []>} : vector<8x8xf32>, vector<8x16xf32>, vector<8x16xf32> -> vector<8x16xf32>
    %cst_19 = arith.constant 0.000000e+00 : f32
    %37 = vector.broadcast %cst_19 : f32 to vector<8x16xf32>
    %38 = arith.cmpf ogt, %36, %37 : vector<8x16xf32>
    %cst_20 = arith.constant 0.000000e+00 : f32
    %39 = vector.broadcast %cst_20 : f32 to vector<8x16xf32>
    %40 = arith.minimumf %36, %39 : vector<8x16xf32>
    %41 = math.exp %40 : vector<8x16xf32>
    %cst_21 = arith.constant 1.000000e+00 : f32
    %42 = vector.broadcast %cst_21 : f32 to vector<8x16xf32>
    %43 = arith.subf %41, %42 : vector<8x16xf32>
    %44 = arith.select %38, %36, %43 : vector<8x16xi1>, vector<8x16xf32>
    %45 = vector.extract_strided_slice %4 {offsets = [0, 16], sizes = [8, 16], strides = [1, 1]} : vector<8x32xf32> to vector<8x16xf32>
    %46 = vector.extract_strided_slice %6 {offsets = [0, 16], sizes = [1, 16], strides = [1, 1]} : vector<1x32xf32> to vector<1x16xf32>
    %47 = vector.extract_strided_slice %8 {offsets = [0, 16], sizes = [1, 16], strides = [1, 1]} : vector<1x32xf32> to vector<1x16xf32>
    %48 = vector.broadcast %46 : vector<1x16xf32> to vector<8x16xf32>
    %49 = arith.mulf %45, %48 : vector<8x16xf32>
    %cst_22 = arith.constant dense<0.000000e+00> : vector<8xf32>
    %50 = vector.multi_reduction <add>, %49, %cst_22 [1] : vector<8x16xf32> to vector<8xf32>
    %51 = vector.shape_cast %50 : vector<8xf32> to vector<8x1xf32>
    %cst_23 = arith.constant dense<0.000000e+00> : vector<1x8xf32>
    %52 = tpu.matmul %47, %45, %cst_23 {dimension_numbers = #tpu.dot_dimension_numbers<[1], [1], [0], [0], [0, 0, 1, 0], [], []>} : vector<1x16xf32>, vector<8x16xf32>, vector<1x8xf32> -> vector<1x8xf32>
    %53 = vector.broadcast %51 : vector<8x1xf32> to vector<8x8xf32>
    %54 = vector.broadcast %52 : vector<1x8xf32> to vector<8x8xf32>
    %55 = arith.addf %53, %54 : vector<8x8xf32>
    %cst_24 = arith.constant 0.000000e+00 : f32
    %56 = vector.broadcast %cst_24 : f32 to vector<8x8xf32>
    %57 = arith.cmpf oge, %55, %56 : vector<8x8xf32>
    %cst_25 = arith.constant 1.000000e-01 : f32
    %58 = vector.broadcast %cst_25 : f32 to vector<8x8xf32>
    %59 = arith.mulf %58, %55 : vector<8x8xf32>
    %60 = arith.select %57, %55, %59 : vector<8x8xi1>, vector<8x8xf32>
    %61 = arith.addf %60, %1 : vector<8x8xf32>
    %cst_26 = arith.constant dense<0xFF800000> : vector<8xf32>
    %62 = vector.multi_reduction <maximumf>, %61, %cst_26 [1] : vector<8x8xf32> to vector<8xf32>
    %63 = vector.shape_cast %62 : vector<8xf32> to vector<8x1xf32>
    %64 = vector.broadcast %63 : vector<8x1xf32> to vector<8x8xf32>
    %65 = arith.subf %61, %64 : vector<8x8xf32>
    %66 = math.exp %65 : vector<8x8xf32>
    %cst_27 = arith.constant dense<0.000000e+00> : vector<8xf32>
    %67 = vector.multi_reduction <add>, %66, %cst_27 [1] : vector<8x8xf32> to vector<8xf32>
    %68 = vector.shape_cast %67 : vector<8xf32> to vector<8x1xf32>
    %69 = tpu.reciprocal %68 {approx = true} : vector<8x1xf32> -> vector<8x1xf32>
    %70 = vector.broadcast %69 : vector<8x1xf32> to vector<8x8xf32>
    %71 = arith.mulf %66, %70 : vector<8x8xf32>
    %cst_28 = arith.constant dense<0.000000e+00> : vector<8x16xf32>
    %72 = tpu.matmul %71, %45, %cst_28 {dimension_numbers = #tpu.dot_dimension_numbers<[1], [0], [0], [1], [0, 0, 1, 1], [], []>} : vector<8x8xf32>, vector<8x16xf32>, vector<8x16xf32> -> vector<8x16xf32>
    %cst_29 = arith.constant 0.000000e+00 : f32
    %73 = vector.broadcast %cst_29 : f32 to vector<8x16xf32>
    %74 = arith.cmpf ogt, %72, %73 : vector<8x16xf32>
    %cst_30 = arith.constant 0.000000e+00 : f32
    %75 = vector.broadcast %cst_30 : f32 to vector<8x16xf32>
    %76 = arith.minimumf %72, %75 : vector<8x16xf32>
    %77 = math.exp %76 : vector<8x16xf32>
    %cst_31 = arith.constant 1.000000e+00 : f32
    %78 = vector.broadcast %cst_31 : f32 to vector<8x16xf32>
    %79 = arith.subf %77, %78 : vector<8x16xf32>
    %80 = arith.select %74, %72, %79 : vector<8x16xi1>, vector<8x16xf32>
    %81 = tpu.concatenate %44, %80 in 1 : vector<8x16xf32>, vector<8x16xf32> -> vector<8x32xf32>
    %c0_32 = arith.constant 0 : index
    %c0_33 = arith.constant 0 : index
    %c0_34 = arith.constant 0 : index
    %82 = vector.load %arg6[%c0_32, %c0_33, %c0_34] : memref<1x32x32xf32, #tpu.memory_space<vmem>>, vector<1x32x32xf32>
    %83 = vector.shape_cast %82 : vector<1x32x32xf32> to vector<32x32xf32>
    %cst_35 = arith.constant dense<0.000000e+00> : vector<8x32xf32>
    %84 = tpu.matmul %81, %83, %cst_35 {dimension_numbers = #tpu.dot_dimension_numbers<[1], [0], [0], [1], [0, 0, 1, 1], [], []>} : vector<8x32xf32>, vector<32x32xf32>, vector<8x32xf32> -> vector<8x32xf32>
    %c0_36 = arith.constant 0 : index
    %c0_37 = arith.constant 0 : index
    %c0_38 = arith.constant 0 : index
    %85 = vector.load %arg7[%c0_36, %c0_37, %c0_38] : memref<1x1x32xf32, #tpu.memory_space<vmem>>, vector<1x1x32xf32>
    %86 = vector.shape_cast %85 : vector<1x1x32xf32> to vector<1x32xf32>
    %c0_39 = arith.constant 0 : index
    %c0_40 = arith.constant 0 : index
    %c0_41 = arith.constant 0 : index
    %87 = vector.load %arg8[%c0_39, %c0_40, %c0_41] : memref<1x1x32xf32, #tpu.memory_space<vmem>>, vector<1x1x32xf32>
    %88 = vector.shape_cast %87 : vector<1x1x32xf32> to vector<1x32xf32>
    %89 = vector.broadcast %86 : vector<1x32xf32> to vector<8x32xf32>
    %90 = arith.mulf %84, %89 : vector<8x32xf32>
    %cst_42 = arith.constant dense<0.000000e+00> : vector<8xf32>
    %91 = vector.multi_reduction <add>, %90, %cst_42 [1] : vector<8x32xf32> to vector<8xf32>
    %92 = vector.shape_cast %91 : vector<8xf32> to vector<8x1xf32>
    %cst_43 = arith.constant dense<0.000000e+00> : vector<1x8xf32>
    %93 = tpu.matmul %88, %84, %cst_43 {dimension_numbers = #tpu.dot_dimension_numbers<[1], [1], [0], [0], [0, 0, 1, 0], [], []>} : vector<1x32xf32>, vector<8x32xf32>, vector<1x8xf32> -> vector<1x8xf32>
    %94 = vector.broadcast %92 : vector<8x1xf32> to vector<8x8xf32>
    %95 = vector.broadcast %93 : vector<1x8xf32> to vector<8x8xf32>
    %96 = arith.addf %94, %95 : vector<8x8xf32>
    %cst_44 = arith.constant 0.000000e+00 : f32
    %97 = vector.broadcast %cst_44 : f32 to vector<8x8xf32>
    %98 = arith.cmpf oge, %96, %97 : vector<8x8xf32>
    %cst_45 = arith.constant 1.000000e-01 : f32
    %99 = vector.broadcast %cst_45 : f32 to vector<8x8xf32>
    %100 = arith.mulf %99, %96 : vector<8x8xf32>
    %101 = arith.select %98, %96, %100 : vector<8x8xi1>, vector<8x8xf32>
    %102 = arith.addf %101, %1 : vector<8x8xf32>
    %cst_46 = arith.constant dense<0xFF800000> : vector<8xf32>
    %103 = vector.multi_reduction <maximumf>, %102, %cst_46 [1] : vector<8x8xf32> to vector<8xf32>
    %104 = vector.shape_cast %103 : vector<8xf32> to vector<8x1xf32>
    %105 = vector.broadcast %104 : vector<8x1xf32> to vector<8x8xf32>
    %106 = arith.subf %102, %105 : vector<8x8xf32>
    %107 = math.exp %106 : vector<8x8xf32>
    %cst_47 = arith.constant dense<0.000000e+00> : vector<8xf32>
    %108 = vector.multi_reduction <add>, %107, %cst_47 [1] : vector<8x8xf32> to vector<8xf32>
    %109 = vector.shape_cast %108 : vector<8xf32> to vector<8x1xf32>
    %110 = tpu.reciprocal %109 {approx = true} : vector<8x1xf32> -> vector<8x1xf32>
    %111 = vector.broadcast %110 : vector<8x1xf32> to vector<8x8xf32>
    %112 = arith.mulf %107, %111 : vector<8x8xf32>
    %cst_48 = arith.constant dense<0.000000e+00> : vector<8x32xf32>
    %113 = tpu.matmul %112, %84, %cst_48 {dimension_numbers = #tpu.dot_dimension_numbers<[1], [0], [0], [1], [0, 0, 1, 1], [], []>} : vector<8x8xf32>, vector<8x32xf32>, vector<8x32xf32> -> vector<8x32xf32>
    %cst_49 = arith.constant 0.000000e+00 : f32
    %114 = vector.broadcast %cst_49 : f32 to vector<8x32xf32>
    %115 = arith.cmpf ogt, %113, %114 : vector<8x32xf32>
    %cst_50 = arith.constant 0.000000e+00 : f32
    %116 = vector.broadcast %cst_50 : f32 to vector<8x32xf32>
    %117 = arith.minimumf %113, %116 : vector<8x32xf32>
    %118 = math.exp %117 : vector<8x32xf32>
    %cst_51 = arith.constant 1.000000e+00 : f32
    %119 = vector.broadcast %cst_51 : f32 to vector<8x32xf32>
    %120 = arith.subf %118, %119 : vector<8x32xf32>
    %121 = arith.select %115, %113, %120 : vector<8x32xi1>, vector<8x32xf32>
    %cst_52 = arith.constant dense<0xFF800000> : vector<8xf32>
    %122 = vector.multi_reduction <maximumf>, %121, %cst_52 [1] : vector<8x32xf32> to vector<8xf32>
    %123 = vector.shape_cast %122 : vector<8xf32> to vector<8x1xf32>
    %124 = vector.broadcast %123 : vector<8x1xf32> to vector<8x32xf32>
    %125 = arith.subf %121, %124 : vector<8x32xf32>
    %126 = math.exp %125 : vector<8x32xf32>
    %cst_53 = arith.constant dense<0.000000e+00> : vector<8xf32>
    %127 = vector.multi_reduction <add>, %126, %cst_53 [1] : vector<8x32xf32> to vector<8xf32>
    %128 = vector.shape_cast %127 : vector<8xf32> to vector<8x1xf32>
    %129 = tpu.reciprocal %128 {approx = true} : vector<8x1xf32> -> vector<8x1xf32>
    %130 = vector.broadcast %129 : vector<8x1xf32> to vector<8x32xf32>
    %131 = arith.mulf %126, %130 : vector<8x32xf32>
    %c0_54 = arith.constant 0 : index
    %c0_55 = arith.constant 0 : index
    %c0_56 = arith.constant 0 : index
    %132 = vector.load %arg9[%c0_54, %c0_55, %c0_56] : memref<1x8x32xf32, #tpu.memory_space<vmem>>, vector<1x8x32xf32>
    %133 = vector.shape_cast %132 : vector<1x8x32xf32> to vector<8x32xf32>
    %134 = vector.shape_cast %131 : vector<8x32xf32> to vector<1x8x32xf32>
    tpu.vector_store %arg9[%c0_54, %c0_55, %c0_56], %134 {strides = array<i32>} : memref<1x8x32xf32, #tpu.memory_space<vmem>>, vector<1x8x32xf32>,
    return
  }
  func.func @transform_0(%arg0: i32) -> (i32, i32) {
    %c0_i32 = arith.constant 0 : i32
    %c0_i32_0 = arith.constant 0 : i32
    %c0_i32_1 = arith.constant 0 : i32
    return %c0_i32, %c0_i32_0 : i32, i32
  }
  func.func @transform_1(%arg0: i32) -> (i32, i32) {
    %c0_i32 = arith.constant 0 : i32
    %c0_i32_0 = arith.constant 0 : i32
    %c0_i32_1 = arith.constant 0 : i32
    return %c0_i32, %c0_i32_0 : i32, i32
  }
  func.func @transform_2(%arg0: i32) -> (i32, i32, i32) {
    %c0_i32 = arith.constant 0 : i32
    %c0_i32_0 = arith.constant 0 : i32
    %c0_i32_1 = arith.constant 0 : i32
    return %arg0, %c0_i32, %c0_i32_0 : i32, i32, i32
  }
  func.func @transform_3(%arg0: i32) -> (i32, i32, i32) {
    %c0_i32 = arith.constant 0 : i32
    %c0_i32_0 = arith.constant 0 : i32
    %c0_i32_1 = arith.constant 0 : i32
    return %arg0, %c0_i32, %c0_i32_0 : i32, i32, i32
  }
  func.func @transform_4(%arg0: i32) -> (i32, i32, i32) {
    %c0_i32 = arith.constant 0 : i32
    %c0_i32_0 = arith.constant 0 : i32
    %c0_i32_1 = arith.constant 0 : i32
    return %arg0, %c0_i32, %c0_i32_0 : i32, i32, i32
  }
  func.func @transform_5(%arg0: i32) -> (i32, i32, i32) {
    %c0_i32 = arith.constant 0 : i32
    %c0_i32_0 = arith.constant 0 : i32
    %c0_i32_1 = arith.constant 0 : i32
    return %arg0, %c0_i32, %c0_i32_0 : i32, i32, i32
  }
  func.func @transform_6(%arg0: i32) -> (i32, i32, i32) {
    %c0_i32 = arith.constant 0 : i32
    %c0_i32_0 = arith.constant 0 : i32
    %c0_i32_1 = arith.constant 0 : i32
    return %arg0, %c0_i32, %c0_i32_0 : i32, i32, i32
  }
  func.func @transform_7(%arg0: i32) -> (i32, i32, i32) {
    %c0_i32 = arith.constant 0 : i32
    %c0_i32_0 = arith.constant 0 : i32
    %c0_i32_1 = arith.constant 0 : i32
    return %arg0, %c0_i32, %c0_i32_0 : i32, i32, i32
  }
  func.func @transform_8(%arg0: i32) -> (i32, i32, i32) {
    %c0_i32 = arith.constant 0 : i32
    %c0_i32_0 = arith.constant 0 : i32
    %c0_i32_1 = arith.constant 0 : i32
    return %arg0, %c0_i32, %c0_i32_0 : i32, i32, i32
  }
}

</mosaic_0001>

<llo_original>
// kernel: tpu_custom_call.1
$region0: #{tpu_custom_call.1}
  #allocation0 [shape = 'u32[]', space=smem, size = 0x4, offset = 0x4, fixed_abs, tag = 'smem constant byte address 0x4 - core index']
  #allocation1 [shape = 'u32[144,128]{1,0:T(1,128)}', space=vmem, size = 0x12000, scoped, tag = 'internal scratch']
  %s0 = inlined_call_operand.hbm [shape: f32[8,32], index: 0, kind: input, shape index: {}]
  %s1 = inlined_call_operand.hbm [shape: f32[8,8], index: 1, kind: input, shape index: {}]
  %s2 = inlined_call_operand.hbm [shape: f32[2,32,32], index: 2, kind: input, shape index: {}]
  %s3 = inlined_call_operand.vmem [shape: f32[2,1,32], index: 3, kind: input, shape index: {}]
  %s4 = inlined_call_operand.vmem [shape: f32[2,1,32], index: 4, kind: input, shape index: {}]
  %s5 = inlined_call_operand.hbm [shape: f32[2,32,32], index: 5, kind: input, shape index: {}]
  %s6 = inlined_call_operand.vmem [shape: f32[2,1,32], index: 6, kind: input, shape index: {}]
  %s7 = inlined_call_operand.vmem [shape: f32[2,1,32], index: 7, kind: input, shape index: {}]
  %s8 = inlined_call_operand.hbm [shape: f32[2,8,32], index: 8, kind: output, shape index: {}]
  %s9 = sld [smem:[#allocation0]]
  $region81: #{tpu_custom_call.1} parent=0
    _
  %s11 = ssub.s32 1, %s9
  %s12 = scalar_select 0, %s11, %s9
  $region1: #{tpu_custom_call.1} parent=0
    #allocation2 [shape = 'u8[4096]{0}', space=vmem, size = 0x1000, scoped, tag = 'input window, operand 0, single buffered']
    #allocation3 [shape = 's32[2]{0}', space=sflag, size = 0x8, scoped, tag = 'scoped memory for tpu_custom_call.1']
    #allocation4 [shape = 's32[2]{0}', space=sflag, size = 0x8, scoped, tag = 'scoped memory for tpu_custom_call.1']
    #allocation5 [shape = 'u8[4096]{0}', space=vmem, size = 0x1000, scoped, tag = 'input window, operand 1, single buffered']
    #allocation6 [shape = 's32[1]{0}', space=sflag, size = 0x4, scoped, tag = 'scoped memory for tpu_custom_call.1']
    #allocation7 [shape = 'u8[32768]{0}', space=vmem, size = 0x8000, scoped, tag = 'input window, operand 2']
    #allocation8 [shape = 'u8[32768]{0}', space=vmem, size = 0x8000, scoped, tag = 'input window, operand 5']
    #allocation9 [shape = 'u8[8192]{0}', space=vmem, size = 0x2000, scoped, tag = 'output window, operand 0']
    %13 = vsyncpa [#allocation3], 0
    %14 = vsyncpa [#allocation6], 0
    %15 = vsyncpa [#allocation4], 0
    %s16 = scalar_lea.sflag [#allocation4], 1
    %17 = vsyncpa %s16, 0
    loop: start=0, step=1, limit=4
    $region2: #{tpu_custom_call.1} parent=1 // loop_pre_header
      _
    $region3: #{tpu_custom_call.1} parent=1 // loop_header
      %s19 = sphi 0, %s23
      %p20 = scmp.ge.s32.totalorder %s19, 4
      %s27 = sphi 0, %s27
      %s29 = sphi 0, %s27
      %s30 = sphi 0, %s29
      %s44 = sphi 0, %s30
      %s48 = sphi 0, %s48
      %s50 = sphi 0, %s48
      %s51 = sphi 0, %s50
      %s65 = sphi 0, %s51
      %s71 = sphi 0, %s73
      %s74 = sphi 0, %s71
      %s75 = sphi 0, %s74
      %s91 = sphi 0, %s75
      %s97 = sphi 0, %s99
      %s100 = sphi 0, %s97
      %s101 = sphi 0, %s100
      %s117 = sphi 0, %s101
      %s123 = sphi 0, %s125
      %s126 = sphi 0, %s123
      %s127 = sphi 0, %s126
      %s143 = sphi 0, %s127
      %s149 = sphi 0, %s151
      %s152 = sphi 0, %s149
      %s153 = sphi 0, %s152
      %s169 = sphi 0, %s153
      %s175 = sphi 0, %s177
      %s178 = sphi 0, %s175
      %s179 = sphi 0, %s178
      %s195 = sphi 0, %s179
      %s201 = sphi 0, %s203
      %s204 = sphi 0, %s201
      %s205 = sphi 0, %s204
      %s221 = sphi 0, %s205
      %s227 = sphi 0, %s229
      %s230 = sphi 0, %s227
      %s231 = sphi 0, %s230
      %s247 = sphi 0, %s231
    $region4: #{tpu_custom_call.1} parent=1 // loop_header_branch
      %22 = sbr.rel (%p20) target = $region8
    $region5: #{tpu_custom_call.1} parent=1 // loop_body
      %s24 = ssub.s32 %s19, 1
      %s25 = ssub.s32 %s19, 2
      %s26 = sadd.s32 %s19, 1
      %s28 = sadd.s32 %s27, 1
      %p31 = scmp.eq.s32.totalorder %s19, 1
      %p32 = scmp.ne.s32.totalorder %s27, %s29
      %p33 = scmp.eq.s32.totalorder %s19, 0
      %p34 = por %p32, %p33
      %p35 = scmp.ne.s32.totalorder %s27, %s29
      %p36 = scmp.eq.s32.totalorder %s24, 1
      %p37 = por %p35, %p36
      %p38 = scmp.ne.s32.totalorder %s29, %s30
      %p39 = scmp.eq.s32.totalorder %s24, 0
      %p40 = por %p38, %p39
      %p41 = scmp.ne.s32.totalorder %s29, %s30
      %p42 = scmp.eq.s32.totalorder %s25, 1
      %p43 = por %p41, %p42
      %p45 = scmp.ne.s32.totalorder %s30, %s44
      %p46 = scmp.eq.s32.totalorder %s25, 0
      %p47 = por %p45, %p46
      %s49 = sadd.s32 %s48, 1
      %p52 = scmp.eq.s32.totalorder %s19, 1
      %p53 = scmp.ne.s32.totalorder %s48, %s50
      %p54 = scmp.eq.s32.totalorder %s19, 0
      %p55 = por %p53, %p54
      %p56 = scmp.ne.s32.totalorder %s48, %s50
      %p57 = scmp.eq.s32.totalorder %s24, 1
      %p58 = por %p56, %p57
      %p59 = scmp.ne.s32.totalorder %s50, %s51
      %p60 = scmp.eq.s32.totalorder %s24, 0
      %p61 = por %p59, %p60
      %p62 = scmp.ne.s32.totalorder %s50, %s51
      %p63 = scmp.eq.s32.totalorder %s25, 1
      %p64 = por %p62, %p63
      %p66 = scmp.ne.s32.totalorder %s51, %s65
      %p67 = scmp.eq.s32.totalorder %s25, 0
      %p68 = por %p66, %p67
      %s69 = ssub.s32 %s19, %s26
      %p70 = scmp.eq.s32.totalorder %s69, 0
      %s72 = sadd.s32 %s71, 1
      %s73 = scalar_select %p70, %s71, %s72
      %p76 = pneg %p70
      %p77 = scmp.eq.s32.totalorder %s19, 1
      %p78 = por %p76, %p77
      %p79 = scmp.ne.s32.totalorder %s71, %s74
      %p80 = scmp.eq.s32.totalorder %s19, 0
      %p81 = por %p79, %p80
      %p82 = scmp.ne.s32.totalorder %s71, %s74
      %p83 = scmp.eq.s32.totalorder %s24, 1
      %p84 = por %p82, %p83
      %p85 = scmp.ne.s32.totalorder %s74, %s75
      %p86 = scmp.eq.s32.totalorder %s24, 0
      %p87 = por %p85, %p86
      %p88 = scmp.ne.s32.totalorder %s74, %s75
      %p89 = scmp.eq.s32.totalorder %s25, 1
      %p90 = por %p88, %p89
      %p92 = scmp.ne.s32.totalorder %s75, %s91
      %p93 = scmp.eq.s32.totalorder %s25, 0
      %p94 = por %p92, %p93
      %s95 = ssub.s32 %s19, %s26
      %p96 = scmp.eq.s32.totalorder %s95, 0
      %s98 = sadd.s32 %s97, 1
      %s99 = scalar_select %p96, %s97, %s98
      %p102 = pneg %p96
      %p103 = scmp.eq.s32.totalorder %s19, 1
      %p104 = por %p102, %p103
      %p105 = scmp.ne.s32.totalorder %s97, %s100
      %p106 = scmp.eq.s32.totalorder %s19, 0
      %p107 = por %p105, %p106
      %p108 = scmp.ne.s32.totalorder %s97, %s100
      %p109 = scmp.eq.s32.totalorder %s24, 1
      %p110 = por %p108, %p109
      %p111 = scmp.ne.s32.totalorder %s100, %s101
      %p112 = scmp.eq.s32.totalorder %s24, 0
      %p113 = por %p111, %p112
      %p114 = scmp.ne.s32.totalorder %s100, %s101
      %p115 = scmp.eq.s32.totalorder %s25, 1
      %p116 = por %p114, %p115
      %p118 = scmp.ne.s32.totalorder %s101, %s117
      %p119 = scmp.eq.s32.totalorder %s25, 0
      %p120 = por %p118, %p119
      %s121 = ssub.s32 %s19, %s26
      %p122 = scmp.eq.s32.totalorder %s121, 0
      %s124 = sadd.s32 %s123, 1
      %s125 = scalar_select %p122, %s123, %s124
      %p128 = pneg %p122
      %p129 = scmp.eq.s32.totalorder %s19, 1
      %p130 = por %p128, %p129
      %p131 = scmp.ne.s32.totalorder %s123, %s126
      %p132 = scmp.eq.s32.totalorder %s19, 0
      %p133 = por %p131, %p132
      %p134 = scmp.ne.s32.totalorder %s123, %s126
      %p135 = scmp.eq.s32.totalorder %s24, 1
      %p136 = por %p134, %p135
      %p137 = scmp.ne.s32.totalorder %s126, %s127
      %p138 = scmp.eq.s32.totalorder %s24, 0
      %p139 = por %p137, %p138
      %p140 = scmp.ne.s32.totalorder %s126, %s127
      %p141 = scmp.eq.s32.totalorder %s25, 1
      %p142 = por %p140, %p141
      %p144 = scmp.ne.s32.totalorder %s127, %s143
      %p145 = scmp.eq.s32.totalorder %s25, 0
      %p146 = por %p144, %p145
      %s147 = ssub.s32 %s19, %s26
      %p148 = scmp.eq.s32.totalorder %s147, 0
      %s150 = sadd.s32 %s149, 1
      %s151 = scalar_select %p148, %s149, %s150
      %p154 = pneg %p148
      %p155 = scmp.eq.s32.totalorder %s19, 1
      %p156 = por %p154, %p155
      %p157 = scmp.ne.s32.totalorder %s149, %s152
      %p158 = scmp.eq.s32.totalorder %s19, 0
      %p159 = por %p157, %p158
      %p160 = scmp.ne.s32.totalorder %s149, %s152
      %p161 = scmp.eq.s32.totalorder %s24, 1
      %p162 = por %p160, %p161
      %p163 = scmp.ne.s32.totalorder %s152, %s153
      %p164 = scmp.eq.s32.totalorder %s24, 0
      %p165 = por %p163, %p164
      %p166 = scmp.ne.s32.totalorder %s152, %s153
      %p167 = scmp.eq.s32.totalorder %s25, 1
      %p168 = por %p166, %p167
      %p170 = scmp.ne.s32.totalorder %s153, %s169
      %p171 = scmp.eq.s32.totalorder %s25, 0
      %p172 = por %p170, %p171
      %s173 = ssub.s32 %s19, %s26
      %p174 = scmp.eq.s32.totalorder %s173, 0
      %s176 = sadd.s32 %s175, 1
      %s177 = scalar_select %p174, %s175, %s176
      %p180 = pneg %p174
      %p181 = scmp.eq.s32.totalorder %s19, 1
      %p182 = por %p180, %p181
      %p183 = scmp.ne.s32.totalorder %s175, %s178
      %p184 = scmp.eq.s32.totalorder %s19, 0
      %p185 = por %p183, %p184
      %p186 = scmp.ne.s32.totalorder %s175, %s178
      %p187 = scmp.eq.s32.totalorder %s24, 1
      %p188 = por %p186, %p187
      %p189 = scmp.ne.s32.totalorder %s178, %s179
      %p190 = scmp.eq.s32.totalorder %s24, 0
      %p191 = por %p189, %p190
      %p192 = scmp.ne.s32.totalorder %s178, %s179
      %p193 = scmp.eq.s32.totalorder %s25, 1
      %p194 = por %p192, %p193
      %p196 = scmp.ne.s32.totalorder %s179, %s195
      %p197 = scmp.eq.s32.totalorder %s25, 0
      %p198 = por %p196, %p197
      %s199 = ssub.s32 %s19, %s26
      %p200 = scmp.eq.s32.totalorder %s199, 0
      %s202 = sadd.s32 %s201, 1
      %s203 = scalar_select %p200, %s201, %s202
      %p206 = pneg %p200
      %p207 = scmp.eq.s32.totalorder %s19, 1
      %p208 = por %p206, %p207
      %p209 = scmp.ne.s32.totalorder %s201, %s204
      %p210 = scmp.eq.s32.totalorder %s19, 0
      %p211 = por %p209, %p210
      %p212 = scmp.ne.s32.totalorder %s201, %s204
      %p213 = scmp.eq.s32.totalorder %s24, 1
      %p214 = por %p212, %p213
      %p215 = scmp.ne.s32.totalorder %s204, %s205
      %p216 = scmp.eq.s32.totalorder %s24, 0
      %p217 = por %p215, %p216
      %p218 = scmp.ne.s32.totalorder %s204, %s205
      %p219 = scmp.eq.s32.totalorder %s25, 1
      %p220 = por %p218, %p219
      %p222 = scmp.ne.s32.totalorder %s205, %s221
      %p223 = scmp.eq.s32.totalorder %s25, 0
      %p224 = por %p222, %p223
      %s225 = ssub.s32 %s19, %s26
      %p226 = scmp.eq.s32.totalorder %s225, 0
      %s228 = sadd.s32 %s227, 1
      %s229 = scalar_select %p226, %s227, %s228
      %p232 = pneg %p226
      %p233 = scmp.eq.s32.totalorder %s19, 1
      %p234 = por %p232, %p233
      %p235 = scmp.ne.s32.totalorder %s227, %s230
      %p236 = scmp.eq.s32.totalorder %s19, 0
      %p237 = por %p235, %p236
      %p238 = scmp.ne.s32.totalorder %s227, %s230
      %p239 = scmp.eq.s32.totalorder %s24, 1
      %p240 = por %p238, %p239
      %p241 = scmp.ne.s32.totalorder %s230, %s231
      %p242 = scmp.eq.s32.totalorder %s24, 0
      %p243 = por %p241, %p242
      %p244 = scmp.ne.s32.totalorder %s230, %s231
      %p245 = scmp.eq.s32.totalorder %s25, 1
      %p246 = por %p244, %p245
      %p248 = scmp.ne.s32.totalorder %s231, %s247
      %p249 = scmp.eq.s32.totalorder %s25, 0
      %p250 = por %p248, %p249
      %p251 = scmp.le.s32.totalorder 1, %s19
      %p252 = scmp.lt.s32.totalorder %s19, 3
      %p253 = pnand %p251, %p252
      %p254 = pneg %p253
      // Predicated region
      $region9: #{tpu_custom_call.1} parent=5 // pred_check
        _
      $region10: #{tpu_custom_call.1} parent=5 // pred_check_branch
        %256 = sbr.rel (%p253) target = $region12
      $region11: #{tpu_custom_call.1} parent=5 // pred_region
        %s257 = ssub.s32 %s19, 1
        // Predicated region
        $region13: #{tpu_custom_call.1} parent=11 // pred_check
          %p258 = pneg %p40
        $region14: #{tpu_custom_call.1} parent=11 // pred_check_branch
          %260 = sbr.rel (%p258) target = $region16
        $region15: #{tpu_custom_call.1} parent=11 // pred_region
          %s262 = ssub.s32 128, 128
          %263 = vsyncadd [#allocation3], %s262
          %s265 = sshll.u32 [#allocation2], 4
          %s266 = int_to_ptr.vmem [resolvable:$true] %s265
          %268 = dma.hbm_to_vmem [thread:$0]  %s0, 128, %s266, [#allocation3]
        $region16: #{tpu_custom_call.1} parent=11 // pred_fallthru
          _
        // Predicated region
        $region17: #{tpu_custom_call.1} parent=11 // pred_check
          %p269 = pneg %p61
        $region18: #{tpu_custom_call.1} parent=11 // pred_check_branch
          %271 = sbr.rel (%p269) target = $region20
        $region19: #{tpu_custom_call.1} parent=11 // pred_region
          %s273 = ssub.s32 128, 128
          %274 = vsyncadd [#allocation6], %s273
          %s276 = sshll.u32 [#allocation5], 4
          %s277 = int_to_ptr.vmem [resolvable:$true] %s276
          %279 = dma.hbm_to_vmem [thread:$0]  %s1, 128, %s277, [#allocation6]
        $region20: #{tpu_custom_call.1} parent=11 // pred_fallthru
          _
      $region12: #{tpu_custom_call.1} parent=5 // pred_fallthru
        _
      %p280 = scmp.lt.s32.totalorder %s19, 2
      // Predicated region
      $region21: #{tpu_custom_call.1} parent=5 // pred_check
        %p281 = pneg %p280
      $region22: #{tpu_custom_call.1} parent=5 // pred_check_branch
        %283 = sbr.rel (%p281) target = $region24
      $region23: #{tpu_custom_call.1} parent=5 // pred_region
        // Predicated region
        $region25: #{tpu_custom_call.1} parent=23 // pred_check
          %p284 = pneg %p81
        $region26: #{tpu_custom_call.1} parent=23 // pred_check_branch
          %286 = sbr.rel (%p284) target = $region28
        $region27: #{tpu_custom_call.1} parent=23 // pred_region
          %s287 = sand.u32 %s19, 1
          %s288 = scalar_lea.sflag [#allocation3], %s287
          %s289 = sand.u32 %s71, 1
          %s290 = smul.addr %s289, 32
          %s291 = scalar_lea.vmem [#allocation7], %s290
          %s293 = ssub.s32 512, 512
          %294 = vsyncadd %s288, %s293
          %s295 = smul.addr %s19, 4
          %s296 = smul.addr %s295, 128
          %s297 = scalar_lea.hbm %s2, %s296
          %s298 = sshll.u32 %s291, 4
          %s299 = int_to_ptr.vmem [resolvable:$true] %s298
          %304 = dma.hbm_to_vmem [thread:$0]  %s297, 512, %s299, %s288, 128, 128, 8
        $region28: #{tpu_custom_call.1} parent=23 // pred_fallthru
          _
        // Predicated region
        $region29: #{tpu_custom_call.1} parent=23 // pred_check
          %p305 = pneg %p107
        $region30: #{tpu_custom_call.1} parent=23 // pred_check_branch
          %307 = sbr.rel (%p305) target = $region32
        $region31: #{tpu_custom_call.1} parent=23 // pred_region
          %p308 = scmp.lt.s32.totalorder %s19, 1
          %s309 = scalar_select %p308, %s19, 1
          %s310 = scalar_lea.vmem %s3, %s309
        $region32: #{tpu_custom_call.1} parent=23 // pred_fallthru
          _
        // Predicated region
        $region33: #{tpu_custom_call.1} parent=23 // pred_check
          %p311 = pneg %p133
        $region34: #{tpu_custom_call.1} parent=23 // pred_check_branch
          %313 = sbr.rel (%p311) target = $region36
        $region35: #{tpu_custom_call.1} parent=23 // pred_region
          %p314 = scmp.lt.s32.totalorder %s19, 1
          %s315 = scalar_select %p314, %s19, 1
          %s316 = scalar_lea.vmem %s4, %s315
        $region36: #{tpu_custom_call.1} parent=23 // pred_fallthru
          _
        // Predicated region
        $region37: #{tpu_custom_call.1} parent=23 // pred_check
          %p317 = pneg %p159
        $region38: #{tpu_custom_call.1} parent=23 // pred_check_branch
          %319 = sbr.rel (%p317) target = $region40
        $region39: #{tpu_custom_call.1} parent=23 // pred_region
          %s320 = sand.u32 %s19, 1
          %s321 = scalar_lea.sflag [#allocation3], %s320
          %s322 = sand.u32 %s149, 1
          %s323 = smul.addr %s322, 32
          %s324 = scalar_lea.vmem [#allocation8], %s323
          %s326 = ssub.s32 512, 512
          %327 = vsyncadd %s321, %s326
          %s328 = smul.addr %s19, 4
          %s329 = smul.addr %s328, 128
          %s330 = scalar_lea.hbm %s5, %s329
          %s331 = sshll.u32 %s324, 4
          %s332 = int_to_ptr.vmem [resolvable:$true] %s331
          %337 = dma.hbm_to_vmem [thread:$0]  %s330, 512, %s332, %s321, 128, 128, 8
        $region40: #{tpu_custom_call.1} parent=23 // pred_fallthru
          _
        // Predicated region
        $region41: #{tpu_custom_call.1} parent=23 // pred_check
          %p338 = pneg %p185
        $region42: #{tpu_custom_call.1} parent=23 // pred_check_branch
          %340 = sbr.rel (%p338) target = $region44
        $region43: #{tpu_custom_call.1} parent=23 // pred_region
          %p341 = scmp.lt.s32.totalorder %s19, 1
          %s342 = scalar_select %p341, %s19, 1
          %s343 = scalar_lea.vmem %s6, %s342
        $region44: #{tpu_custom_call.1} parent=23 // pred_fallthru
          _
        // Predicated region
        $region45: #{tpu_custom_call.1} parent=23 // pred_check
          %p344 = pneg %p211
        $region46: #{tpu_custom_call.1} parent=23 // pred_check_branch
          %346 = sbr.rel (%p344) target = $region48
        $region47: #{tpu_custom_call.1} parent=23 // pred_region
          %p347 = scmp.lt.s32.totalorder %s19, 1
          %s348 = scalar_select %p347, %s19, 1
          %s349 = scalar_lea.vmem %s7, %s348
        $region48: #{tpu_custom_call.1} parent=23 // pred_fallthru
          _
      $region24: #{tpu_custom_call.1} parent=5 // pred_fallthru
        _
      %p350 = scmp.le.s32.totalorder 1, %s19
      %p351 = scmp.lt.s32.totalorder %s19, 3
      %p352 = pnand %p350, %p351
      %p353 = pneg %p352
      // Predicated region
      $region49: #{tpu_custom_call.1} parent=5 // pred_check
        _
      $region50: #{tpu_custom_call.1} parent=5 // pred_check_branch
        %355 = sbr.rel (%p352) target = $region52
      $region51: #{tpu_custom_call.1} parent=5 // pred_region
        %s356 = ssub.s32 %s19, 1
        // Predicated region
        $region53: #{tpu_custom_call.1} parent=51 // pred_check
          %p357 = pneg %p40
        $region54: #{tpu_custom_call.1} parent=51 // pred_check_branch
          %359 = sbr.rel (%p357) target = $region56
        $region55: #{tpu_custom_call.1} parent=51 // pred_region
          %360 = dma.done [#allocation3], 128
        $region56: #{tpu_custom_call.1} parent=51 // pred_fallthru
          _
        // Predicated region
        $region57: #{tpu_custom_call.1} parent=51 // pred_check
          %p361 = pneg %p61
        $region58: #{tpu_custom_call.1} parent=51 // pred_check_branch
          %363 = sbr.rel (%p361) target = $region60
        $region59: #{tpu_custom_call.1} parent=51 // pred_region
          %364 = dma.done [#allocation6], 128
        $region60: #{tpu_custom_call.1} parent=51 // pred_fallthru
          _
        %s365 = sand.u32 %s24, 1
        %s366 = scalar_lea.sflag [#allocation3], %s365
        %s367 = sand.u32 %s74, 1
        %s368 = smul.addr %s367, 32
        %s369 = scalar_lea.vmem [#allocation7], %s368
        // Predicated region
        $region61: #{tpu_custom_call.1} parent=51 // pred_check
          %p370 = pneg %p87
        $region62: #{tpu_custom_call.1} parent=51 // pred_check_branch
          %372 = sbr.rel (%p370) target = $region64
        $region63: #{tpu_custom_call.1} parent=51 // pred_region
          %373 = dma.done %s366, 512
        $region64: #{tpu_custom_call.1} parent=51 // pred_fallthru
          _
        %s374 = sand.u32 %s24, 1
        %s375 = scalar_lea.sflag [#allocation3], %s374
        %s376 = sand.u32 %s152, 1
        %s377 = smul.addr %s376, 32
        %s378 = scalar_lea.vmem [#allocation8], %s377
        // Predicated region
        $region65: #{tpu_custom_call.1} parent=51 // pred_check
          %p379 = pneg %p165
        $region66: #{tpu_custom_call.1} parent=51 // pred_check_branch
          %381 = sbr.rel (%p379) target = $region68
        $region67: #{tpu_custom_call.1} parent=51 // pred_region
          %382 = dma.done %s375, 512
        $region68: #{tpu_custom_call.1} parent=51 // pred_fallthru
          _
        %p383 = pneg %p40
        %p384 = pneg %p37
        %p385 = pneg %p61
        %p386 = pneg %p58
        %s387 = sand.u32 %s24, 1
        %s388 = scalar_lea.sflag [#allocation3], %s387
        %s389 = sand.u32 %s74, 1
        %s390 = smul.addr %s389, 32
        %s391 = scalar_lea.vmem [#allocation7], %s390
        %p392 = pneg %p87
        %p393 = pneg %p84
        %p394 = scmp.lt.s32.totalorder %s24, 1
        %s395 = scalar_select %p394, %s24, 1
        %s396 = scalar_lea.vmem %s3, %s395
        %p397 = pneg %p113
        %p398 = pneg %p110
        %p399 = scmp.lt.s32.totalorder %s24, 1
        %s400 = scalar_select %p399, %s24, 1
        %s401 = scalar_lea.vmem %s4, %s400
        %p402 = pneg %p139
        %p403 = pneg %p136
        %s404 = sand.u32 %s24, 1
        %s405 = scalar_lea.sflag [#allocation3], %s404
        %s406 = sand.u32 %s152, 1
        %s407 = smul.addr %s406, 32
        %s408 = scalar_lea.vmem [#allocation8], %s407
        %p409 = pneg %p165
        %p410 = pneg %p162
        %p411 = scmp.lt.s32.totalorder %s24, 1
        %s412 = scalar_select %p411, %s24, 1
        %s413 = scalar_lea.vmem %s6, %s412
        %p414 = pneg %p191
        %p415 = pneg %p188
        %p416 = scmp.lt.s32.totalorder %s24, 1
        %s417 = scalar_select %p416, %s24, 1
        %s418 = scalar_lea.vmem %s7, %s417
        %p419 = pneg %p217
        %p420 = pneg %p214
        %p421 = pneg %p243
        %p422 = pneg %p240
        %s423 = sand.u32 %s230, 1
        %s424 = scalar_lea.sflag [#allocation4], %s423
        %s425 = sand.u32 %s230, 1
        %s426 = smul.addr %s425, 8
        %s427 = scalar_lea.vmem [#allocation9], %s426
        %p428 = scmp.lt.s32.totalorder %s24, 1
        %s429 = scalar_select %p428, %s24, 1
        %s430 = scalar_lea.vmem %s3, %s429
        %p431 = scmp.lt.s32.totalorder %s24, 1
        %s432 = scalar_select %p431, %s24, 1
        %s433 = scalar_lea.vmem %s4, %s432
        %p434 = scmp.lt.s32.totalorder %s24, 1
        %s435 = scalar_select %p434, %s24, 1
        %s436 = scalar_lea.vmem %s6, %s435
        %p437 = scmp.lt.s32.totalorder %s24, 1
        %s438 = scalar_select %p437, %s24, 1
        %s439 = scalar_lea.vmem %s7, %s438
        %v440 = vld [vmem:[#allocation2] sm:$0xff]
        %v441 = vld [vmem:[#allocation5] sm:$0xff]
        %v442 = vld [vmem:[%s369] sm:$0xff]
        %v443 = vld [vmem:[%s369 + $0x8] sm:$0xff]
        %v444 = vld [vmem:[%s369 + $0x10] sm:$0xff]
        %v445 = vld [vmem:[%s369 + $0x18] sm:$0xff]
        %vm446 = vcmask 261120
        %v448 = vsel %vm446, %v440, 0
        %450 = vmatprep.subr.mxu0 0.0
        %451 = vmatpush1.msra.mxu0 %v442
        %452 = vmatprep.subr.mxu0 0.0
        %453 = vmatpush1.msra.mxu0 %v443
        %454 = vmatprep.subr.mxu0 0.0
        %455 = vmatpush1.msra.mxu0 %v444
        %456 = vmatprep.subr.mxu0 0.0
        %457 = vmatpush1.msra.mxu0 %v445
        %458 = vmatprep.subr.mxu0 0.0
        %459 = vmatpush1.msra.mxu0 0.0
        %460 = vmatprep.subr.mxu0 0.0
        %461 = vmatpush1.msra.mxu0 0.0
        %462 = vmatprep.subr.mxu0 0.0
        %463 = vmatpush1.msra.mxu0 0.0
        %464 = vmatprep.subr.mxu0 0.0
        %465 = vmatpush1.msra.mxu0 0.0
        %466 = vmatprep.subr.mxu0 0.0
        %467 = vmatpush1.msra.mxu0 0.0
        %468 = vmatprep.subr.mxu0 0.0
        %469 = vmatpush1.msra.mxu0 0.0
        %470 = vmatprep.subr.mxu0 0.0
        %471 = vmatpush1.msra.mxu0 0.0
        %472 = vmatprep.subr.mxu0 0.0
        %473 = vmatpush1.msra.mxu0 0.0
        %474 = vmatprep.subr.mxu0 0.0
        %475 = vmatpush1.msra.mxu0 0.0
        %476 = vmatprep.subr.mxu0 0.0
        %477 = vmatpush1.msra.mxu0 0.0
        %478 = vmatprep.subr.mxu0 0.0
        %479 = vmatpush1.msra.mxu0 0.0
        %480 = vmatprep.subr.mxu0 0.0
        %481 = vmatpush1.msra.mxu0 0.0
        %482 = vmatprep.subr.mxu0 0.0
        %483 = vmatpush1.msra.mxu0 0.0
        %484 = vmatprep.subr.mxu0 0.0
        %485 = vmatpush1.msra.mxu0 0.0
        %486 = vmatprep.subr.mxu0 0.0
        %487 = vmatpush1.msra.mxu0 0.0
        %488 = vmatprep.subr.mxu0 0.0
        %489 = vmatpush1.msra.mxu0 0.0
        %490 = vmatprep.subr.mxu0 0.0
        %491 = vmatpush1.msra.mxu0 0.0
        %492 = vmatprep.subr.mxu0 0.0
        %493 = vmatpush1.msra.mxu0 0.0
        %494 = vmatprep.subr.mxu0 0.0
        %495 = vmatpush1.msra.mxu0 0.0
        %496 = vmatprep.subr.mxu0 0.0
        %497 = vmatpush1.msra.mxu0 0.0
        %498 = vmatprep.subr.mxu0 0.0
        %499 = vmatpush1.msra.mxu0 0.0
        %500 = vmatprep.subr.mxu0 0.0
        %501 = vmatpush1.msra.mxu0 0.0
        %502 = vmatprep.subr.mxu0 0.0
        %503 = vmatpush1.msra.mxu0 0.0
        %504 = vmatprep.subr.mxu0 0.0
        %505 = vmatpush1.msra.mxu0 0.0
        %506 = vmatprep.subr.mxu0 0.0
        %507 = vmatpush1.msra.mxu0 0.0
        %508 = vmatprep.subr.mxu0 0.0
        %509 = vmatpush1.msra.mxu0 0.0
        %510 = vmatprep.subr.mxu0 0.0
        %511 = vmatpush1.msra.mxu0 0.0
        %512 = vmatprep.subr.mxu0 0.0
        %513 = vmatpush1.msra.mxu0 0.0
        %514 = vmatprep.mubr.f32.mxu0 0.0
        %515 = vmatmul.mubr.f32.gmra.mrb[0].mxu0 %v448
        %v516 = vpop.f32.mrb[0].mxu0
        %v517 = vadd.f32 0.0, %v516
        %v518 = vpop.f32.mrb[0].mxu0
        %519 = vdwg.mxu0
        %v520 = vld [vmem:[%s430] sm:$0x1]
        %v521 = vld [vmem:[%s433] sm:$0x1]
        %v523 = vlaneseq
        %v524 = vshrl.u32 %v523, 7
        %v525 = vsub.s32 0, %v524
        %v526 = vrot.slane %v520, %v525
        %v528 = vmul.f32 %v517, %v526
        %vm529 = vcmask 130048
        %v530 = vsel %vm529, %v528, 0.0
        %531 = vadd.xlane.f32.xlu0 %v530
        %v532 = vpop.xlane.xlu0 %531
        %v534 = vsel %vm529, %v521, 0
        %v537 = vsel %vm529, %v517, 0
        %539 = vmatprep.subr.mxu0 0.0
        %540 = vmatpush1.xpose.msra.mxu0 %v537
        %541 = vmatprep.subr.mxu0 0.0
        %542 = vmatpush1.xpose.msra.mxu0 0.0
        %543 = vmatprep.subr.mxu0 0.0
        %544 = vmatpush1.xpose.msra.mxu0 0.0
        %545 = vmatprep.subr.mxu0 0.0
        %546 = vmatpush1.xpose.msra.mxu0 0.0
        %547 = vmatprep.subr.mxu0 0.0
        %548 = vmatpush1.xpose.msra.mxu0 0.0
        %549 = vmatprep.subr.mxu0 0.0
        %550 = vmatpush1.xpose.msra.mxu0 0.0
        %551 = vmatprep.subr.mxu0 0.0
        %552 = vmatpush1.xpose.msra.mxu0 0.0
        %553 = vmatprep.subr.mxu0 0.0
        %554 = vmatpush1.xpose.msra.mxu0 0.0
        %555 = vmatprep.subr.mxu0 0.0
        %556 = vmatpush1.xpose.msra.mxu0 0.0
        %557 = vmatprep.subr.mxu0 0.0
        %558 = vmatpush1.xpose.msra.mxu0 0.0
        %559 = vmatprep.subr.mxu0 0.0
        %560 = vmatpush1.xpose.msra.mxu0 0.0
        %561 = vmatprep.subr.mxu0 0.0
        %562 = vmatpush1.xpose.msra.mxu0 0.0
        %563 = vmatprep.subr.mxu0 0.0
        %564 = vmatpush1.xpose.msra.mxu0 0.0
        %565 = vmatprep.subr.mxu0 0.0
        %566 = vmatpush1.xpose.msra.mxu0 0.0
        %567 = vmatprep.subr.mxu0 0.0
        %568 = vmatpush1.xpose.msra.mxu0 0.0
        %569 = vmatprep.subr.mxu0 0.0
        %570 = vmatpush1.xpose.msra.mxu0 0.0
        %571 = vmatprep.subr.mxu0 0.0
        %572 = vmatpush1.xpose.msra.mxu0 0.0
        %573 = vmatprep.subr.mxu0 0.0
        %574 = vmatpush1.xpose.msra.mxu0 0.0
        %575 = vmatprep.subr.mxu0 0.0
        %576 = vmatpush1.xpose.msra.mxu0 0.0
        %577 = vmatprep.subr.mxu0 0.0
        %578 = vmatpush1.xpose.msra.mxu0 0.0
        %579 = vmatprep.subr.mxu0 0.0
        %580 = vmatpush1.xpose.msra.mxu0 0.0
        %581 = vmatprep.subr.mxu0 0.0
        %582 = vmatpush1.xpose.msra.mxu0 0.0
        %583 = vmatprep.subr.mxu0 0.0
        %584 = vmatpush1.xpose.msra.mxu0 0.0
        %585 = vmatprep.subr.mxu0 0.0
        %586 = vmatpush1.xpose.msra.mxu0 0.0
        %587 = vmatprep.subr.mxu0 0.0
        %588 = vmatpush1.xpose.msra.mxu0 0.0
        %589 = vmatprep.subr.mxu0 0.0
        %590 = vmatpush1.xpose.msra.mxu0 0.0
        %591 = vmatprep.subr.mxu0 0.0
        %592 = vmatpush1.xpose.msra.mxu0 0.0
        %593 = vmatprep.subr.mxu0 0.0
        %594 = vmatpush1.xpose.msra.mxu0 0.0
        %595 = vmatprep.subr.mxu0 0.0
        %596 = vmatpush1.xpose.msra.mxu0 0.0
        %597 = vmatprep.subr.mxu0 0.0
        %598 = vmatpush1.xpose.msra.mxu0 0.0
        %599 = vmatprep.subr.mxu0 0.0
        %600 = vmatpush1.xpose.msra.mxu0 0.0
        %601 = vmatprep.subr.mxu0 0.0
        %602 = vmatpush1.xpose.msra.mxu0 0.0
        %603 = vmatprep.mubr.f32.mxu0 0.0
        %604 = vmatmul.mubr.f32.gmra.mrb[0].mxu0 %v534
        %v605 = vpop.f32.mrb[0].mxu0
        %v606 = vadd.f32 0.0, %v605
        %v607 = vpop.f32.mrb[0].mxu0
        %608 = vdwg.mxu0
        %v609 = vlaneseq
        %v610 = vshrl.u32 %v609, 7
        %v611 = vsub.s32 0, %v610
        %v612 = vrot.slane %v606, %v611
        %v613 = vadd.f32 %v532, %v612
        %vm614 = vcmp.ge.f32.partialorder %v613, 0.0
        %v615 = vmul.f32 %v613, 0.1
        %v616 = vsel %vm614, %v613, %v615
        %v617 = vadd.f32 %v616, %v441
        %vm618 = vcmask 64512
        %v619 = vsel %vm618, %v617, -inf
        %620 = vmax.xlane.f32.xlu0 %v619
        %v621 = vpop.xlane.xlu0 %620
        %v622 = vsub.f32 %v617, %v621
        %v623 = vmul.f32 %v622, 1.442695
        %v624 = vpow.pop %v623
        %v625 = vsel %vm618, %v624, 0.0
        %626 = vadd.xlane.f32.xlu0 %v625
        %v627 = vpop.xlane.xlu0 %626
        %v628 = vrcp.pop %v627
        %v629 = vmul.f32 %v624, %v628
        %v631 = vsel %vm618, %v629, 0
        %633 = vmatprep.subr.mxu0 0.0
        %634 = vmatpush1.msra.mxu0 %v517
        %635 = vmatprep.subr.mxu0 0.0
        %636 = vmatpush1.msra.mxu0 0.0
        %637 = vmatprep.subr.mxu0 0.0
        %638 = vmatpush1.msra.mxu0 0.0
        %639 = vmatprep.subr.mxu0 0.0
        %640 = vmatpush1.msra.mxu0 0.0
        %641 = vmatprep.subr.mxu0 0.0
        %642 = vmatpush1.msra.mxu0 0.0
        %643 = vmatprep.subr.mxu0 0.0
        %644 = vmatpush1.msra.mxu0 0.0
        %645 = vmatprep.subr.mxu0 0.0
        %646 = vmatpush1.msra.mxu0 0.0
        %647 = vmatprep.subr.mxu0 0.0
        %648 = vmatpush1.msra.mxu0 0.0
        %649 = vmatprep.subr.mxu0 0.0
        %650 = vmatpush1.msra.mxu0 0.0
        %651 = vmatprep.subr.mxu0 0.0
        %652 = vmatpush1.msra.mxu0 0.0
        %653 = vmatprep.subr.mxu0 0.0
        %654 = vmatpush1.msra.mxu0 0.0
        %655 = vmatprep.subr.mxu0 0.0
        %656 = vmatpush1.msra.mxu0 0.0
        %657 = vmatprep.subr.mxu0 0.0
        %658 = vmatpush1.msra.mxu0 0.0
        %659 = vmatprep.subr.mxu0 0.0
        %660 = vmatpush1.msra.mxu0 0.0
        %661 = vmatprep.subr.mxu0 0.0
        %662 = vmatpush1.msra.mxu0 0.0
        %663 = vmatprep.subr.mxu0 0.0
        %664 = vmatpush1.msra.mxu0 0.0
        %665 = vmatprep.subr.mxu0 0.0
        %666 = vmatpush1.msra.mxu0 0.0
        %667 = vmatprep.subr.mxu0 0.0
        %668 = vmatpush1.msra.mxu0 0.0
        %669 = vmatprep.subr.mxu0 0.0
        %670 = vmatpush1.msra.mxu0 0.0
        %671 = vmatprep.subr.mxu0 0.0
        %672 = vmatpush1.msra.mxu0 0.0
        %673 = vmatprep.subr.mxu0 0.0
        %674 = vmatpush1.msra.mxu0 0.0
        %675 = vmatprep.subr.mxu0 0.0
        %676 = vmatpush1.msra.mxu0 0.0
        %677 = vmatprep.subr.mxu0 0.0
        %678 = vmatpush1.msra.mxu0 0.0
        %679 = vmatprep.subr.mxu0 0.0
        %680 = vmatpush1.msra.mxu0 0.0
        %681 = vmatprep.subr.mxu0 0.0
        %682 = vmatpush1.msra.mxu0 0.0
        %683 = vmatprep.subr.mxu0 0.0
        %684 = vmatpush1.msra.mxu0 0.0
        %685 = vmatprep.subr.mxu0 0.0
        %686 = vmatpush1.msra.mxu0 0.0
        %687 = vmatprep.subr.mxu0 0.0
        %688 = vmatpush1.msra.mxu0 0.0
        %689 = vmatprep.subr.mxu0 0.0
        %690 = vmatpush1.msra.mxu0 0.0
        %691 = vmatprep.subr.mxu0 0.0
        %692 = vmatpush1.msra.mxu0 0.0
        %693 = vmatprep.subr.mxu0 0.0
        %694 = vmatpush1.msra.mxu0 0.0
        %695 = vmatprep.subr.mxu0 0.0
        %696 = vmatpush1.msra.mxu0 0.0
        %697 = vmatprep.mubr.f32.mxu0 0.0
        %698 = vmatmul.mubr.f32.gmra.mrb[0].mxu0 %v631
        %v699 = vpop.f32.mrb[0].mxu0
        %v700 = vadd.f32 0.0, %v699
        %v701 = vpop.f32.mrb[0].mxu0
        %702 = vdwg.mxu0
        %vm703 = vcmp.gt.f32.partialorder %v700, 0.0
        %v704 = vmin.f32 %v700, 0.0
        %v705 = vmul.f32 %v704, 1.442695
        %v706 = vpow.pop %v705
        %v707 = vsub.f32 %v706, 1.0
        %v708 = vsel %vm703, %v700, %v707
        %710 = vrot.lane.b32.xlu0 %v528, 112
        %v711 = vpop.permute.xlu0 %710
        %v713 = vsel %vm529, %v711, 0.0
        %714 = vadd.xlane.f32.xlu0 %v713
        %v715 = vpop.xlane.xlu0 %714
        %v716 = vlaneseq
        %v717 = vshrl.u32 %v716, 7
        %v718 = vsub.s32 0, %v717
        %v719 = vrot.slane %v521, %v718
        %720 = vrot.lane.b32.xlu0 %v719, 112
        %v721 = vpop.permute.xlu0 %720
        %722 = vrot.lane.b32.xlu0 %v517, 112
        %v723 = vpop.permute.xlu0 %722
        %v724 = vsel %vm529, %v721, 0
        %v726 = vsel %vm529, %v723, 0
        %728 = vmatprep.subr.mxu0 0.0
        %729 = vmatpush1.xpose.msra.mxu0 %v726
        %730 = vmatprep.subr.mxu0 0.0
        %731 = vmatpush1.xpose.msra.mxu0 0.0
        %732 = vmatprep.subr.mxu0 0.0
        %733 = vmatpush1.xpose.msra.mxu0 0.0
        %734 = vmatprep.subr.mxu0 0.0
        %735 = vmatpush1.xpose.msra.mxu0 0.0
        %736 = vmatprep.subr.mxu0 0.0
        %737 = vmatpush1.xpose.msra.mxu0 0.0
        %738 = vmatprep.subr.mxu0 0.0
        %739 = vmatpush1.xpose.msra.mxu0 0.0
        %740 = vmatprep.subr.mxu0 0.0
        %741 = vmatpush1.xpose.msra.mxu0 0.0
        %742 = vmatprep.subr.mxu0 0.0
        %743 = vmatpush1.xpose.msra.mxu0 0.0
        %744 = vmatprep.subr.mxu0 0.0
        %745 = vmatpush1.xpose.msra.mxu0 0.0
        %746 = vmatprep.subr.mxu0 0.0
        %747 = vmatpush1.xpose.msra.mxu0 0.0
        %748 = vmatprep.subr.mxu0 0.0
        %749 = vmatpush1.xpose.msra.mxu0 0.0
        %750 = vmatprep.subr.mxu0 0.0
        %751 = vmatpush1.xpose.msra.mxu0 0.0
        %752 = vmatprep.subr.mxu0 0.0
        %753 = vmatpush1.xpose.msra.mxu0 0.0
        %754 = vmatprep.subr.mxu0 0.0
        %755 = vmatpush1.xpose.msra.mxu0 0.0
        %756 = vmatprep.subr.mxu0 0.0
        %757 = vmatpush1.xpose.msra.mxu0 0.0
        %758 = vmatprep.subr.mxu0 0.0
        %759 = vmatpush1.xpose.msra.mxu0 0.0
        %760 = vmatprep.subr.mxu0 0.0
        %761 = vmatpush1.xpose.msra.mxu0 0.0
        %762 = vmatprep.subr.mxu0 0.0
        %763 = vmatpush1.xpose.msra.mxu0 0.0
        %764 = vmatprep.subr.mxu0 0.0
        %765 = vmatpush1.xpose.msra.mxu0 0.0
        %766 = vmatprep.subr.mxu0 0.0
        %767 = vmatpush1.xpose.msra.mxu0 0.0
        %768 = vmatprep.subr.mxu0 0.0
        %769 = vmatpush1.xpose.msra.mxu0 0.0
        %770 = vmatprep.subr.mxu0 0.0
        %771 = vmatpush1.xpose.msra.mxu0 0.0
        %772 = vmatprep.subr.mxu0 0.0
        %773 = vmatpush1.xpose.msra.mxu0 0.0
        %774 = vmatprep.subr.mxu0 0.0
        %775 = vmatpush1.xpose.msra.mxu0 0.0
        %776 = vmatprep.subr.mxu0 0.0
        %777 = vmatpush1.xpose.msra.mxu0 0.0
        %778 = vmatprep.subr.mxu0 0.0
        %779 = vmatpush1.xpose.msra.mxu0 0.0
        %780 = vmatprep.subr.mxu0 0.0
        %781 = vmatpush1.xpose.msra.mxu0 0.0
        %782 = vmatprep.subr.mxu0 0.0
        %783 = vmatpush1.xpose.msra.mxu0 0.0
        %784 = vmatprep.subr.mxu0 0.0
        %785 = vmatpush1.xpose.msra.mxu0 0.0
        %786 = vmatprep.subr.mxu0 0.0
        %787 = vmatpush1.xpose.msra.mxu0 0.0
        %788 = vmatprep.subr.mxu0 0.0
        %789 = vmatpush1.xpose.msra.mxu0 0.0
        %790 = vmatprep.subr.mxu0 0.0
        %791 = vmatpush1.xpose.msra.mxu0 0.0
        %792 = vmatprep.mubr.f32.mxu0 0.0
        %793 = vmatmul.mubr.f32.gmra.mrb[0].mxu0 %v724
        %v794 = vpop.f32.mrb[0].mxu0
        %v795 = vadd.f32 0.0, %v794
        %v796 = vpop.f32.mrb[0].mxu0
        %797 = vdwg.mxu0
        %v798 = vlaneseq
        %v799 = vshrl.u32 %v798, 7
        %v800 = vsub.s32 0, %v799
        %v801 = vrot.slane %v795, %v800
        %v802 = vadd.f32 %v715, %v801
        %vm803 = vcmp.ge.f32.partialorder %v802, 0.0
        %v804 = vmul.f32 %v802, 0.1
        %v805 = vsel %vm803, %v802, %v804
        %v806 = vadd.f32 %v805, %v441
        %v807 = vsel %vm618, %v806, -inf
        %808 = vmax.xlane.f32.xlu0 %v807
        %v809 = vpop.xlane.xlu0 %808
        %v810 = vsub.f32 %v806, %v809
        %v811 = vmul.f32 %v810, 1.442695
        %v812 = vpow.pop %v811
        %v813 = vsel %vm618, %v812, 0.0
        %814 = vadd.xlane.f32.xlu0 %v813
        %v815 = vpop.xlane.xlu0 %814
        %v816 = vrcp.pop %v815
        %v817 = vmul.f32 %v812, %v816
        %v820 = vsel %vm618, %v817, 0
        %822 = vmatprep.subr.mxu0 0.0
        %823 = vmatpush1.msra.mxu0 %v723
        %824 = vmatprep.subr.mxu0 0.0
        %825 = vmatpush1.msra.mxu0 0.0
        %826 = vmatprep.subr.mxu0 0.0
        %827 = vmatpush1.msra.mxu0 0.0
        %828 = vmatprep.subr.mxu0 0.0
        %829 = vmatpush1.msra.mxu0 0.0
        %830 = vmatprep.subr.mxu0 0.0
        %831 = vmatpush1.msra.mxu0 0.0
        %832 = vmatprep.subr.mxu0 0.0
        %833 = vmatpush1.msra.mxu0 0.0
        %834 = vmatprep.subr.mxu0 0.0
        %835 = vmatpush1.msra.mxu0 0.0
        %836 = vmatprep.subr.mxu0 0.0
        %837 = vmatpush1.msra.mxu0 0.0
        %838 = vmatprep.subr.mxu0 0.0
        %839 = vmatpush1.msra.mxu0 0.0
        %840 = vmatprep.subr.mxu0 0.0
        %841 = vmatpush1.msra.mxu0 0.0
        %842 = vmatprep.subr.mxu0 0.0
        %843 = vmatpush1.msra.mxu0 0.0
        %844 = vmatprep.subr.mxu0 0.0
        %845 = vmatpush1.msra.mxu0 0.0
        %846 = vmatprep.subr.mxu0 0.0
        %847 = vmatpush1.msra.mxu0 0.0
        %848 = vmatprep.subr.mxu0 0.0
        %849 = vmatpush1.msra.mxu0 0.0
        %850 = vmatprep.subr.mxu0 0.0
        %851 = vmatpush1.msra.mxu0 0.0
        %852 = vmatprep.subr.mxu0 0.0
        %853 = vmatpush1.msra.mxu0 0.0
        %854 = vmatprep.subr.mxu0 0.0
        %855 = vmatpush1.msra.mxu0 0.0
        %856 = vmatprep.subr.mxu0 0.0
        %857 = vmatpush1.msra.mxu0 0.0
        %858 = vmatprep.subr.mxu0 0.0
        %859 = vmatpush1.msra.mxu0 0.0
        %860 = vmatprep.subr.mxu0 0.0
        %861 = vmatpush1.msra.mxu0 0.0
        %862 = vmatprep.subr.mxu0 0.0
        %863 = vmatpush1.msra.mxu0 0.0
        %864 = vmatprep.subr.mxu0 0.0
        %865 = vmatpush1.msra.mxu0 0.0
        %866 = vmatprep.subr.mxu0 0.0
        %867 = vmatpush1.msra.mxu0 0.0
        %868 = vmatprep.subr.mxu0 0.0
        %869 = vmatpush1.msra.mxu0 0.0
        %870 = vmatprep.subr.mxu0 0.0
        %871 = vmatpush1.msra.mxu0 0.0
        %872 = vmatprep.subr.mxu0 0.0
        %873 = vmatpush1.msra.mxu0 0.0
        %874 = vmatprep.subr.mxu0 0.0
        %875 = vmatpush1.msra.mxu0 0.0
        %876 = vmatprep.subr.mxu0 0.0
        %877 = vmatpush1.msra.mxu0 0.0
        %878 = vmatprep.subr.mxu0 0.0
        %879 = vmatpush1.msra.mxu0 0.0
        %880 = vmatprep.subr.mxu0 0.0
        %881 = vmatpush1.msra.mxu0 0.0
        %882 = vmatprep.subr.mxu0 0.0
        %883 = vmatpush1.msra.mxu0 0.0
        %884 = vmatprep.subr.mxu0 0.0
        %885 = vmatpush1.msra.mxu0 0.0
        %886 = vmatprep.mubr.f32.mxu0 0.0
        %887 = vmatmul.mubr.f32.gmra.mrb[0].mxu0 %v820
        %v888 = vpop.f32.mrb[0].mxu0
        %v889 = vadd.f32 0.0, %v888
        %v890 = vpop.f32.mrb[0].mxu0
        %891 = vdwg.mxu0
        %vm892 = vcmp.gt.f32.partialorder %v889, 0.0
        %v893 = vmin.f32 %v889, 0.0
        %v894 = vmul.f32 %v893, 1.442695
        %v895 = vpow.pop %v894
        %v896 = vsub.f32 %v895, 1.0
        %v897 = vsel %vm892, %v889, %v896
        %899 = vrot.lane.b32.xlu0 %v897, 16
        %v900 = vpop.permute.xlu0 %899
        %v902 = vsel %vm529, %v708, %v900
        %v903 = vld [vmem:[%s378] sm:$0xff]
        %v904 = vld [vmem:[%s378 + $0x8] sm:$0xff]
        %v905 = vld [vmem:[%s378 + $0x10] sm:$0xff]
        %v906 = vld [vmem:[%s378 + $0x18] sm:$0xff]
        %v908 = vsel %vm446, %v902, 0
        %910 = vmatprep.subr.mxu0 0.0
        %911 = vmatpush1.msra.mxu0 %v903
        %912 = vmatprep.subr.mxu0 0.0
        %913 = vmatpush1.msra.mxu0 %v904
        %914 = vmatprep.subr.mxu0 0.0
        %915 = vmatpush1.msra.mxu0 %v905
        %916 = vmatprep.subr.mxu0 0.0
        %917 = vmatpush1.msra.mxu0 %v906
        %918 = vmatprep.subr.mxu0 0.0
        %919 = vmatpush1.msra.mxu0 0.0
        %920 = vmatprep.subr.mxu0 0.0
        %921 = vmatpush1.msra.mxu0 0.0
        %922 = vmatprep.subr.mxu0 0.0
        %923 = vmatpush1.msra.mxu0 0.0
        %924 = vmatprep.subr.mxu0 0.0
        %925 = vmatpush1.msra.mxu0 0.0
        %926 = vmatprep.subr.mxu0 0.0
        %927 = vmatpush1.msra.mxu0 0.0
        %928 = vmatprep.subr.mxu0 0.0
        %929 = vmatpush1.msra.mxu0 0.0
        %930 = vmatprep.subr.mxu0 0.0
        %931 = vmatpush1.msra.mxu0 0.0
        %932 = vmatprep.subr.mxu0 0.0
        %933 = vmatpush1.msra.mxu0 0.0
        %934 = vmatprep.subr.mxu0 0.0
        %935 = vmatpush1.msra.mxu0 0.0
        %936 = vmatprep.subr.mxu0 0.0
        %937 = vmatpush1.msra.mxu0 0.0
        %938 = vmatprep.subr.mxu0 0.0
        %939 = vmatpush1.msra.mxu0 0.0
        %940 = vmatprep.subr.mxu0 0.0
        %941 = vmatpush1.msra.mxu0 0.0
        %942 = vmatprep.subr.mxu0 0.0
        %943 = vmatpush1.msra.mxu0 0.0
        %944 = vmatprep.subr.mxu0 0.0
        %945 = vmatpush1.msra.mxu0 0.0
        %946 = vmatprep.subr.mxu0 0.0
        %947 = vmatpush1.msra.mxu0 0.0
        %948 = vmatprep.subr.mxu0 0.0
        %949 = vmatpush1.msra.mxu0 0.0
        %950 = vmatprep.subr.mxu0 0.0
        %951 = vmatpush1.msra.mxu0 0.0
        %952 = vmatprep.subr.mxu0 0.0
        %953 = vmatpush1.msra.mxu0 0.0
        %954 = vmatprep.subr.mxu0 0.0
        %955 = vmatpush1.msra.mxu0 0.0
        %956 = vmatprep.subr.mxu0 0.0
        %957 = vmatpush1.msra.mxu0 0.0
        %958 = vmatprep.subr.mxu0 0.0
        %959 = vmatpush1.msra.mxu0 0.0
        %960 = vmatprep.subr.mxu0 0.0
        %961 = vmatpush1.msra.mxu0 0.0
        %962 = vmatprep.subr.mxu0 0.0
        %963 = vmatpush1.msra.mxu0 0.0
        %964 = vmatprep.subr.mxu0 0.0
        %965 = vmatpush1.msra.mxu0 0.0
        %966 = vmatprep.subr.mxu0 0.0
        %967 = vmatpush1.msra.mxu0 0.0
        %968 = vmatprep.subr.mxu0 0.0
        %969 = vmatpush1.msra.mxu0 0.0
        %970 = vmatprep.subr.mxu0 0.0
        %971 = vmatpush1.msra.mxu0 0.0
        %972 = vmatprep.subr.mxu0 0.0
        %973 = vmatpush1.msra.mxu0 0.0
        %974 = vmatprep.mubr.f32.mxu0 0.0
        %975 = vmatmul.mubr.f32.gmra.mrb[0].mxu0 %v908
        %v976 = vpop.f32.mrb[0].mxu0
        %v977 = vadd.f32 0.0, %v976
        %v978 = vpop.f32.mrb[0].mxu0
        %979 = vdwg.mxu0
        %v980 = vld [vmem:[%s436] sm:$0x1]
        %v981 = vld [vmem:[%s439] sm:$0x1]
        %v983 = vlaneseq
        %v984 = vshrl.u32 %v983, 7
        %v985 = vsub.s32 0, %v984
        %v986 = vrot.slane %v980, %v985
        %v988 = vmul.f32 %v977, %v986
        %v989 = vsel %vm446, %v988, 0.0
        %990 = vadd.xlane.f32.xlu0 %v989
        %v991 = vpop.xlane.xlu0 %990
        %v993 = vsel %vm446, %v981, 0
        %v996 = vsel %vm446, %v977, 0
        %998 = vmatprep.subr.mxu0 0.0
        %999 = vmatpush1.xpose.msra.mxu0 %v996
        %1000 = vmatprep.subr.mxu0 0.0
        %1001 = vmatpush1.xpose.msra.mxu0 0.0
        %1002 = vmatprep.subr.mxu0 0.0
        %1003 = vmatpush1.xpose.msra.mxu0 0.0
        %1004 = vmatprep.subr.mxu0 0.0
        %1005 = vmatpush1.xpose.msra.mxu0 0.0
        %1006 = vmatprep.subr.mxu0 0.0
        %1007 = vmatpush1.xpose.msra.mxu0 0.0
        %1008 = vmatprep.subr.mxu0 0.0
        %1009 = vmatpush1.xpose.msra.mxu0 0.0
        %1010 = vmatprep.subr.mxu0 0.0
        %1011 = vmatpush1.xpose.msra.mxu0 0.0
        %1012 = vmatprep.subr.mxu0 0.0
        %1013 = vmatpush1.xpose.msra.mxu0 0.0
        %1014 = vmatprep.subr.mxu0 0.0
        %1015 = vmatpush1.xpose.msra.mxu0 0.0
        %1016 = vmatprep.subr.mxu0 0.0
        %1017 = vmatpush1.xpose.msra.mxu0 0.0
        %1018 = vmatprep.subr.mxu0 0.0
        %1019 = vmatpush1.xpose.msra.mxu0 0.0
        %1020 = vmatprep.subr.mxu0 0.0
        %1021 = vmatpush1.xpose.msra.mxu0 0.0
        %1022 = vmatprep.subr.mxu0 0.0
        %1023 = vmatpush1.xpose.msra.mxu0 0.0
        %1024 = vmatprep.subr.mxu0 0.0
        %1025 = vmatpush1.xpose.msra.mxu0 0.0
        %1026 = vmatprep.subr.mxu0 0.0
        %1027 = vmatpush1.xpose.msra.mxu0 0.0
        %1028 = vmatprep.subr.mxu0 0.0
        %1029 = vmatpush1.xpose.msra.mxu0 0.0
        %1030 = vmatprep.subr.mxu0 0.0
        %1031 = vmatpush1.xpose.msra.mxu0 0.0
        %1032 = vmatprep.subr.mxu0 0.0
        %1033 = vmatpush1.xpose.msra.mxu0 0.0
        %1034 = vmatprep.subr.mxu0 0.0
        %1035 = vmatpush1.xpose.msra.mxu0 0.0
        %1036 = vmatprep.subr.mxu0 0.0
        %1037 = vmatpush1.xpose.msra.mxu0 0.0
        %1038 = vmatprep.subr.mxu0 0.0
        %1039 = vmatpush1.xpose.msra.mxu0 0.0
        %1040 = vmatprep.subr.mxu0 0.0
        %1041 = vmatpush1.xpose.msra.mxu0 0.0
        %1042 = vmatprep.subr.mxu0 0.0
        %1043 = vmatpush1.xpose.msra.mxu0 0.0
        %1044 = vmatprep.subr.mxu0 0.0
        %1045 = vmatpush1.xpose.msra.mxu0 0.0
        %1046 = vmatprep.subr.mxu0 0.0
        %1047 = vmatpush1.xpose.msra.mxu0 0.0
        %1048 = vmatprep.subr.mxu0 0.0
        %1049 = vmatpush1.xpose.msra.mxu0 0.0
        %1050 = vmatprep.subr.mxu0 0.0
        %1051 = vmatpush1.xpose.msra.mxu0 0.0
        %1052 = vmatprep.subr.mxu0 0.0
        %1053 = vmatpush1.xpose.msra.mxu0 0.0
        %1054 = vmatprep.subr.mxu0 0.0
        %1055 = vmatpush1.xpose.msra.mxu0 0.0
        %1056 = vmatprep.subr.mxu0 0.0
        %1057 = vmatpush1.xpose.msra.mxu0 0.0
        %1058 = vmatprep.subr.mxu0 0.0
        %1059 = vmatpush1.xpose.msra.mxu0 0.0
        %1060 = vmatprep.subr.mxu0 0.0
        %1061 = vmatpush1.xpose.msra.mxu0 0.0
        %1062 = vmatprep.mubr.f32.mxu0 0.0
        %1063 = vmatmul.mubr.f32.gmra.mrb[0].mxu0 %v993
        %v1064 = vpop.f32.mrb[0].mxu0
        %v1065 = vadd.f32 0.0, %v1064
        %v1066 = vpop.f32.mrb[0].mxu0
        %1067 = vdwg.mxu0
        %v1068 = vlaneseq
        %v1069 = vshrl.u32 %v1068, 7
        %v1070 = vsub.s32 0, %v1069
        %v1071 = vrot.slane %v1065, %v1070
        %v1072 = vadd.f32 %v991, %v1071
        %vm1073 = vcmp.ge.f32.partialorder %v1072, 0.0
        %v1074 = vmul.f32 %v1072, 0.1
        %v1075 = vsel %vm1073, %v1072, %v1074
        %v1076 = vadd.f32 %v1075, %v441
        %v1077 = vsel %vm618, %v1076, -inf
        %1078 = vmax.xlane.f32.xlu0 %v1077
        %v1079 = vpop.xlane.xlu0 %1078
        %v1080 = vsub.f32 %v1076, %v1079
        %v1081 = vmul.f32 %v1080, 1.442695
        %v1082 = vpow.pop %v1081
        %v1083 = vsel %vm618, %v1082, 0.0
        %1084 = vadd.xlane.f32.xlu0 %v1083
        %v1085 = vpop.xlane.xlu0 %1084
        %v1086 = vrcp.pop %v1085
        %v1087 = vmul.f32 %v1082, %v1086
        %v1089 = vsel %vm618, %v1087, 0
        %1091 = vmatprep.subr.mxu0 0.0
        %1092 = vmatpush1.msra.mxu0 %v977
        %1093 = vmatprep.subr.mxu0 0.0
        %1094 = vmatpush1.msra.mxu0 0.0
        %1095 = vmatprep.subr.mxu0 0.0
        %1096 = vmatpush1.msra.mxu0 0.0
        %1097 = vmatprep.subr.mxu0 0.0
        %1098 = vmatpush1.msra.mxu0 0.0
        %1099 = vmatprep.subr.mxu0 0.0
        %1100 = vmatpush1.msra.mxu0 0.0
        %1101 = vmatprep.subr.mxu0 0.0
        %1102 = vmatpush1.msra.mxu0 0.0
        %1103 = vmatprep.subr.mxu0 0.0
        %1104 = vmatpush1.msra.mxu0 0.0
        %1105 = vmatprep.subr.mxu0 0.0
        %1106 = vmatpush1.msra.mxu0 0.0
        %1107 = vmatprep.subr.mxu0 0.0
        %1108 = vmatpush1.msra.mxu0 0.0
        %1109 = vmatprep.subr.mxu0 0.0
        %1110 = vmatpush1.msra.mxu0 0.0
        %1111 = vmatprep.subr.mxu0 0.0
        %1112 = vmatpush1.msra.mxu0 0.0
        %1113 = vmatprep.subr.mxu0 0.0
        %1114 = vmatpush1.msra.mxu0 0.0
        %1115 = vmatprep.subr.mxu0 0.0
        %1116 = vmatpush1.msra.mxu0 0.0
        %1117 = vmatprep.subr.mxu0 0.0
        %1118 = vmatpush1.msra.mxu0 0.0
        %1119 = vmatprep.subr.mxu0 0.0
        %1120 = vmatpush1.msra.mxu0 0.0
        %1121 = vmatprep.subr.mxu0 0.0
        %1122 = vmatpush1.msra.mxu0 0.0
        %1123 = vmatprep.subr.mxu0 0.0
        %1124 = vmatpush1.msra.mxu0 0.0
        %1125 = vmatprep.subr.mxu0 0.0
        %1126 = vmatpush1.msra.mxu0 0.0
        %1127 = vmatprep.subr.mxu0 0.0
        %1128 = vmatpush1.msra.mxu0 0.0
        %1129 = vmatprep.subr.mxu0 0.0
        %1130 = vmatpush1.msra.mxu0 0.0
        %1131 = vmatprep.subr.mxu0 0.0
        %1132 = vmatpush1.msra.mxu0 0.0
        %1133 = vmatprep.subr.mxu0 0.0
        %1134 = vmatpush1.msra.mxu0 0.0
        %1135 = vmatprep.subr.mxu0 0.0
        %1136 = vmatpush1.msra.mxu0 0.0
        %1137 = vmatprep.subr.mxu0 0.0
        %1138 = vmatpush1.msra.mxu0 0.0
        %1139 = vmatprep.subr.mxu0 0.0
        %1140 = vmatpush1.msra.mxu0 0.0
        %1141 = vmatprep.subr.mxu0 0.0
        %1142 = vmatpush1.msra.mxu0 0.0
        %1143 = vmatprep.subr.mxu0 0.0
        %1144 = vmatpush1.msra.mxu0 0.0
        %1145 = vmatprep.subr.mxu0 0.0
        %1146 = vmatpush1.msra.mxu0 0.0
        %1147 = vmatprep.subr.mxu0 0.0
        %1148 = vmatpush1.msra.mxu0 0.0
        %1149 = vmatprep.subr.mxu0 0.0
        %1150 = vmatpush1.msra.mxu0 0.0
        %1151 = vmatprep.subr.mxu0 0.0
        %1152 = vmatpush1.msra.mxu0 0.0
        %1153 = vmatprep.subr.mxu0 0.0
        %1154 = vmatpush1.msra.mxu0 0.0
        %1155 = vmatprep.mubr.f32.mxu0 0.0
        %1156 = vmatmul.mubr.f32.gmra.mrb[0].mxu0 %v1089
        %v1157 = vpop.f32.mrb[0].mxu0
        %v1158 = vadd.f32 0.0, %v1157
        %v1159 = vpop.f32.mrb[0].mxu0
        %1160 = vdwg.mxu0
        %vm1161 = vcmp.gt.f32.partialorder %v1158, 0.0
        %v1162 = vmin.f32 %v1158, 0.0
        %v1163 = vmul.f32 %v1162, 1.442695
        %v1164 = vpow.pop %v1163
        %v1165 = vsub.f32 %v1164, 1.0
        %v1166 = vsel %vm1161, %v1158, %v1165
        %v1167 = vsel %vm446, %v1166, -inf
        %1168 = vmax.xlane.f32.xlu0 %v1167
        %v1169 = vpop.xlane.xlu0 %1168
        %v1170 = vsub.f32 %v1166, %v1169
        %v1171 = vmul.f32 %v1170, 1.442695
        %v1172 = vpow.pop %v1171
        %v1173 = vsel %vm446, %v1172, 0.0
        %1174 = vadd.xlane.f32.xlu0 %v1173
        %v1175 = vpop.xlane.xlu0 %1174
        %v1176 = vrcp.pop %v1175
        %v1177 = vmul.f32 %v1172, %v1176
        %1178 = vst.msk [vmem:[%s427] sm:$0xff] %vm446, %v1177
        %s1179 = sand.u32 %s230, 1
        %s1180 = scalar_lea.sflag [#allocation4], %s1179
        %s1181 = sand.u32 %s230, 1
        %s1182 = smul.addr %s1181, 8
        %s1183 = scalar_lea.vmem [#allocation9], %s1182
        // Predicated region
        $region69: #{tpu_custom_call.1} parent=51 // pred_check
          %p1184 = pneg %p240
        $region70: #{tpu_custom_call.1} parent=51 // pred_check_branch
          %1186 = sbr.rel (%p1184) target = $region72
        $region71: #{tpu_custom_call.1} parent=51 // pred_region
          %s1188 = ssub.s32 128, 128
          %1189 = vsyncadd %s1180, %s1188
          %s1190 = smul.addr %s24, 128
          %s1191 = scalar_lea.hbm %s8, %s1190
          %s1193 = sshll.u32 %s1183, 4
          %s1194 = int_to_ptr.vmem [resolvable:$true] %s1193
          %1196 = dma.vmem_to_hbm [thread:$0]  %s1194, 128, %s1191, %s1180
        $region72: #{tpu_custom_call.1} parent=51 // pred_fallthru
          _
      $region52: #{tpu_custom_call.1} parent=5 // pred_fallthru
        _
      %p1197 = scmp.le.s32.totalorder 2, %s19
      // Predicated region
      $region73: #{tpu_custom_call.1} parent=5 // pred_check
        %p1198 = pneg %p1197
      $region74: #{tpu_custom_call.1} parent=5 // pred_check_branch
        %1200 = sbr.rel (%p1198) target = $region76
      $region75: #{tpu_custom_call.1} parent=5 // pred_region
        %s1201 = ssub.s32 %s19, 2
        // Predicated region
        $region77: #{tpu_custom_call.1} parent=75 // pred_check
          %p1202 = pneg %p246
        $region78: #{tpu_custom_call.1} parent=75 // pred_check_branch
          %1204 = sbr.rel (%p1202) target = $region80
        $region79: #{tpu_custom_call.1} parent=75 // pred_region
          %s1205 = sand.u32 %s231, 1
          %s1206 = scalar_lea.sflag [#allocation4], %s1205
          %s1207 = sand.u32 %s231, 1
          %s1208 = smul.addr %s1207, 8
          %s1209 = scalar_lea.vmem [#allocation9], %s1208
          %1210 = dma.done %s1206, 128
        $region80: #{tpu_custom_call.1} parent=75 // pred_fallthru
          _
      $region76: #{tpu_custom_call.1} parent=5 // pred_fallthru
        _
    $region6: #{tpu_custom_call.1} parent=1 // loop_footer
      %s23 = sadd.s32 1, %s19
    $region7: #{tpu_custom_call.1} parent=1 // loop_footer_branch
      %18 = sbr.rel target = $region3
    $region8: #{tpu_custom_call.1} parent=1 // loop_exit
      _
    %1211 = vsyncpa [#allocation3], 1
    %s1212 = scalar_lea.sflag [#allocation3], 1
    %1213 = vsyncpa %s1212, 1
    %1214 = vsyncpa [#allocation6], 1
    %1215 = vsyncpa [#allocation4], 1
    %s1216 = scalar_lea.sflag [#allocation4], 1
    %1217 = vsyncpa %s1216, 1

</llo_original>
